<compile_context>
chip_gen: v7x
topology: tpu7x:2x2x1
jax: 0.10.0
libtpu: 0.0.40
codegen_flags: <defaults>
</compile_context>

<pallas_src>
import jax
import jax.numpy as jnp
from jax import lax
from jax.experimental import pallas as pl
from jax.experimental.pallas import tpu as pltpu


def _round_up(x, m):
    return ((x + m - 1) // m) * m


# ----------------------------- Pallas kernels ------------------------------ #

def _conv_bias_relu_kernel(p_ref, w_ref, b_ref, o_ref):
    # p_ref: [TM, g*Kp]   bf16 im2col patches (g output pixels grouped per row)
    # w_ref: [g*Kp, g*OC] bf16 block-diagonal BN-scale-folded weights (VMEM resident)
    # b_ref: [1, g*OC]    f32 folded BN bias (VMEM resident)
    # o_ref: [TM, g*OC]   bf16 lane-dense output slab (row-major identical to [TM*g, OC])
    acc = jnp.dot(p_ref[...], w_ref[...], preferred_element_type=jnp.float32)
    o_ref[...] = jnp.maximum(acc + b_ref[...], 0.0).astype(o_ref.dtype)


def _maxpool3x3s2_kernel(even_ref, odd_ref, even_top_ref, odd_top_ref, out_ref):
    # even_ref/odd_ref:         [2*RB, 1, PW, OC] even-/odd-column halves of conv rows
    #                           2*p0 .. 2*p0+2*RB-1 of one image
    # even_top_ref/odd_top_ref: [1, 1, PW, OC] conv row 2*p0-1 (clamped to row 0 at the image
    #                           top; duplicating row 0 is exact for max over >=0 data)
    # out_ref:                  [1, RB, PW, OC] pooled rows p0 .. p0+RB-1
    f32 = jnp.float32
    e = even_ref[:, 0, :, :].astype(f32)        # [2RB, PW, OC]
    o = odd_ref[:, 0, :, :].astype(f32)
    et = even_top_ref[0, 0, :, :].astype(f32)   # [PW, OC]
    ot = odd_top_ref[0, 0, :, :].astype(f32)

    # Per conv row, max over pooling columns {2q-1, 2q, 2q+1} = {odd[q-1], even[q], odd[q]}.
    # q-1 at q=0 is the (left) padding column; duplicating odd[0] (already a member) is exact.
    o_shift = jnp.concatenate([o[:, :1, :], o[:, :-1, :]], axis=1)
    ot_shift = jnp.concatenate([ot[:1, :], ot[:-1, :]], axis=0)
    colmax = jnp.maximum(jnp.maximum(e, o), o_shift)          # [2RB, PW, OC]
    colmax_top = jnp.maximum(jnp.maximum(et, ot), ot_shift)   # [PW, OC]

    # rows[k] = column-max of conv row (2*p0 - 1 + k); pooled row p uses k in {2p, 2p+1, 2p+2}.
    rows = jnp.concatenate([colmax_top[None], colmax], axis=0)  # [2RB+1, PW, OC]
    rb = out_ref.shape[1]
    for p in range(rb):  # short static unroll; row chunking lives on the grid axis
        r = jnp.maximum(jnp.maximum(rows[2 * p], rows[2 * p + 1]), rows[2 * p + 2])
        out_ref[0, p, :, :] = r.astype(out_ref.dtype)


# --------------------------- pallas_call wrappers --------------------------- #

def _pick_conv_tile_m(mg, lanes_k, lanes_n, vmem_budget_bytes=12 * 2 ** 20, max_tile=1024):
    """Largest divisor of mg (multiple of 8, <= max_tile) whose per-step buffers fit the VMEM
    budget, preferring a choice that leaves >= 4 grid steps (pipelining / v7x core split)."""
    def step_bytes(t):
        patch = 2 * t * lanes_k * 2          # double-buffered bf16 patch tiles
        wgt = 2 * lanes_k * lanes_n * 2      # resident bf16 weights (counted x2, conservative)
        outb = 2 * t * lanes_n * 2           # double-buffered bf16 output tiles
        return patch + wgt + outb

    divs = [d for d in range(8, min(mg, max_tile) + 1, 8)
            if mg % d == 0 and step_bytes(d) <= vmem_budget_bytes]
    if not divs:
        return mg                            # full-extent block is always legal
    pref = [d for d in divs if mg // d >= 4]
    return max(pref) if pref else max(divs)


def conv_bias_relu(patches2, w2, bias2, tile_m):
    mg, kg = patches2.shape
    _, nl = w2.shape
    return pl.pallas_call(
        _conv_bias_relu_kernel,
        out_shape=jax.ShapeDtypeStruct((mg, nl), jnp.bfloat16),
        grid=(mg // tile_m,),
        in_specs=[
            pl.BlockSpec((tile_m, kg), lambda i: (i, 0)),   # streamed patch tiles
            pl.BlockSpec((kg, nl), lambda i: (0, 0)),       # resident folded weights
            pl.BlockSpec((1, nl), lambda i: (0, 0)),        # resident folded bias
        ],
        out_specs=pl.BlockSpec((tile_m, nl), lambda i: (i, 0)),
        compiler_params=pltpu.CompilerParams(
            dimension_semantics=("parallel",)),
    )(patches2, w2, bias2)


def maxpool3x3s2(y4, oh, rb):
    # y4: [N*OH, 2, PW, OC] bf16, y4[n*OH + r, b, q, :] = conv output at (n, r, 2*q + b).
    n_oh, _, pw, oc = y4.shape
    n = n_oh // oh
    ph = oh // 2
    blocks_per_img = oh // (2 * rb)

    def main_idx(parity):
        return lambda i, pb: (i * blocks_per_img + pb, parity, 0, 0)

    def halo_idx(parity):
        # conv row 2*p0 - 1, clamped to the top of image i (exact for max pooling).
        return lambda i, pb: (jnp.maximum(i * oh + 2 * rb * pb - 1, i * oh), parity, 0, 0)

    return pl.pallas_call(
        _maxpool3x3s2_kernel,
        out_shape=jax.ShapeDtypeStruct((n, ph, pw, oc), jnp.float32),
        grid=(n, ph // rb),
        in_specs=[
            pl.BlockSpec((2 * rb, 1, pw, oc), main_idx(0)),
            pl.BlockSpec((2 * rb, 1, pw, oc), main_idx(1)),
            pl.BlockSpec((1, 1, pw, oc), halo_idx(0)),
            pl.BlockSpec((1, 1, pw, oc), halo_idx(1)),
        ],
        out_specs=pl.BlockSpec((1, rb, pw, oc), lambda i, pb: (i, pb, 0, 0)),
        compiler_params=pltpu.CompilerParams(
            dimension_semantics=("parallel", "parallel")),
    )(y4, y4, y4, y4)


# ------------------------------ wrapper glue -------------------------------- #

def res_init_block_forward(x_nchw, conv_w, gamma, beta, run_mean, run_var,
                           eps=1e-5, compute_dtype=jnp.bfloat16):
    """ResInitBlock forward.  x_nchw: [N, C, H, W] f32 -> [N, OC, H//4, W//4] f32."""
    N, C, H, W = x_nchw.shape
    OC = conv_w.shape[0]
    KH = KW = 7
    S, P = 2, 3
    OH = (H + 2 * P - KH) // S + 1
    OW = (W + 2 * P - KW) // S + 1
    assert OH % 2 == 0 and OW % 2 == 0, (
        "TODO(synk): odd conv-output sizes need bottom/right pool clamping")
    OWh = OW // 2
    PH, PW = OH // 2, OW // 2

    # ---- Conv 7x7/s2 as an im2col matmul (NHWC so channels ride the lane axis) ----
    x = jnp.transpose(x_nchw, (0, 2, 3, 1)).astype(compute_dtype)   # bf16 halves HBM bytes
    x_pad = jnp.pad(x, ((0, 0), (P, P), (P, P), (0, 0)))
    K = KH * KW * C

    # Patch rows ordered (n, out_row, col_parity, col//2) so the conv output doubles as the
    # column-phase-decomposed pool input with no extra HBM pass.
    # TODO(synk): the patch matrix itself is still one HBM round trip (bf16).
    def phase_patches(b):
        return jnp.stack(
            [x_pad[:,
                   dh:dh + 2 * (OH - 1) + 1:2,
                   2 * b + dw:2 * b + dw + 4 * (OWh - 1) + 1:4,
                   :]
             for dh in range(KH) for dw in range(KW)],
            axis=3,
        ).reshape(N, OH, OWh, K)

    patches = jnp.stack([phase_patches(0), phase_patches(1)], axis=2)  # [N, OH, 2, OWh, K]
    M = N * OH * OW
    patches = patches.reshape(M, K)

    # BN (inference) folded: scale into the weights, bias applied in the kernel epilogue.
    inv_std = 1.0 / jnp.sqrt(run_var + eps)
    scale = gamma * inv_std                                      # [OC]
    bias = beta - run_mean * scale                               # [OC]
    w_mat = jnp.transpose(conv_w, (2, 3, 1, 0)).reshape(K, OC)
    w_fold = w_mat * scale[None, :]

    # Lane packing: g consecutive output pixels per kernel row (block-diagonal weight) so the
    # conv output tile is a 128-lane slab (row-major identical to [TM*g, OC]).
    # (v5e note: g>2 multiplies MXU zero-flops; kept <=4, harmless while HBM-bound.)
    g = min(128 // OC, 4) if (OC < 128 and 128 % OC == 0) else 1
    while g > 1 and M % g:
        g //= 2

    # Contraction dim padded only to a multiple of 128//g (streamed lane dim is g*Kp).
    Kp = _round_up(K, 128 // g)
    patches = jnp.pad(patches, ((0, 0), (0, Kp - K)))
    w_fold = jnp.pad(w_fold, ((0, Kp - K), (0, 0)))

    mg = M // g
    patches2 = patches.reshape(mg, g * Kp)                       # pure row-major regrouping
    w2 = jnp.kron(jnp.eye(g, dtype=jnp.float32), w_fold).astype(compute_dtype)  # [g*Kp, g*OC]
    bias2 = jnp.tile(bias, g).reshape(1, g * OC).astype(jnp.float32)

    tile_m = _pick_conv_tile_m(mg, g * Kp, g * OC)
    y = conv_bias_relu(patches2, w2, bias2, tile_m)              # [mg, g*OC] bf16, lane-dense

    # ---- MaxPool 3x3 / stride 2 / pad 1 ----
    # Row-major bitcast back to (n*OH + row, col_parity, col//2, OC); the pool reads it ~once.
    y4 = y.reshape(N * OH, 2, OWh, OC)
    rb = max(d for d in range(1, min(PH, 8) + 1) if PH % d == 0)
    out = maxpool3x3s2(y4, OH, rb)                               # [N, PH, PW, OC] f32
    return jnp.transpose(out, (0, 3, 1, 2))                      # back to NCHW


# -------------------------------- reference --------------------------------- #

def _reference(x_nchw, conv_w, gamma, beta, run_mean, run_var, eps=1e-5,
               conv_dtype=None):
    scale = gamma / jnp.sqrt(run_var + eps)
    bias = beta - run_mean * scale
    if conv_dtype is not None:
        # Matched-precision reference: same BN-scale folding, same bf16 rounding of inputs and
        # of the stored conv output as the kernel path, but an independent compute path.
        xr = x_nchw.astype(conv_dtype).astype(jnp.float32)
        wr = (conv_w * scale[:, None, None, None]).astype(conv_dtype).astype(jnp.float32)
        y = lax.conv_general_dilated(
            xr, wr, window_strides=(2, 2), padding=((3, 3), (3, 3)),
            dimension_numbers=("NCHW", "OIHW", "NCHW"))
        y = jnp.maximum(y + bias[None, :, None, None], 0.0)
        y = y.astype(conv_dtype).astype(jnp.float32)
    else:
        y = lax.conv_general_dilated(
            x_nchw, conv_w, window_strides=(2, 2), padding=((3, 3), (3, 3)),
            dimension_numbers=("NCHW", "OIHW", "NCHW"))
        y = jnp.maximum(y * scale[None, :, None, None] + bias[None, :, None, None], 0.0)
    return lax.reduce_window(
        y, -jnp.inf, lax.max,
        window_dimensions=(1, 1, 3, 3), window_strides=(1, 1, 2, 2),
        padding=((0, 0), (0, 0), (1, 1), (1, 1)))


# ---------------------------------- main ------------------------------------ #

if __name__ == "__main__":
    key = jax.random.PRNGKey(0)
    k_x, k_w, k_g, k_b, k_m, k_v = jax.random.split(key, 6)

    N, C_IN, H, W = 2, 4, 16, 16
    C_OUT = 32

    x = jax.random.normal(k_x, (N, C_IN, H, W), jnp.float32)
    conv_w = 0.1 * jax.random.normal(k_w, (C_OUT, C_IN, 7, 7), jnp.float32)
    gamma = 0.5 + jax.random.uniform(k_g, (C_OUT,), jnp.float32)
    beta = 0.1 * jax.random.normal(k_b, (C_OUT,), jnp.float32)
    run_mean = 0.1 * jax.random.normal(k_m, (C_OUT,), jnp.float32)
    run_var = 0.5 + jax.random.uniform(k_v, (C_OUT,), jnp.float32)

    fwd = jax.jit(res_init_block_forward)
    out = fwd(x, conv_w, gamma, beta, run_mean, run_var)
    out = jax.block_until_ready(out)
    assert out.shape == (N, C_OUT, H // 4, W // 4), out.shape

    # Tight check against a matched-precision (bf16 conv inputs + bf16 conv output,
    # f32 accumulation) reference.
    ref_matched = _reference(x, conv_w, gamma, beta, run_mean, run_var,
                             conv_dtype=jnp.bfloat16)
    assert jnp.allclose(out, ref_matched, atol=2e-2, rtol=2e-2), \
        float(jnp.max(jnp.abs(out - ref_matched)))

    # Loose sanity check against the pure-f32 module reference (bf16 rounding only).
    ref_f32 = _reference(x, conv_w, gamma, beta, run_mean, run_var)
    assert jnp.allclose(out, ref_f32, atol=1e-1, rtol=1e-1), \
        float(jnp.max(jnp.abs(out - ref_f32)))

    print("KERNEL_OK")
</pallas_src>

<mosaic_0001>
module attributes {stable_mosaic.version = 11 : i64} {
  func.func @_conv_bias_relu_kernel(%arg0: i32, %arg1: memref<8x896xbf16, #tpu.memory_space<vmem>>, %arg2: memref<896x128xbf16, #tpu.memory_space<vmem>>, %arg3: memref<1x128xf32, #tpu.memory_space<vmem>>, %arg4: memref<8x128xbf16, #tpu.memory_space<vmem>>) attributes {dimension_semantics = [#tpu.dimension_semantics<parallel>], iteration_bounds = array<i64: 4>, scalar_prefetch = 0 : i64, scratch_operands = 0 : i64, tpu.core_type = #tpu.core_type<tc>, window_params = [{transform_indices = @transform_0, window_bounds = array<i64: 8, 896>}, {pipeline_mode = #tpu.pipeline_mode<synchronous>, transform_indices = @transform_1, window_bounds = array<i64: 896, 128>}, {pipeline_mode = #tpu.pipeline_mode<synchronous>, transform_indices = @transform_2, window_bounds = array<i64: 1, 128>}, {transform_indices = @transform_3, window_bounds = array<i64: 8, 128>}]} {
    %c0 = arith.constant 0 : index
    %c0_0 = arith.constant 0 : index
    %0 = vector.load %arg1[%c0, %c0_0] : memref<8x896xbf16, #tpu.memory_space<vmem>>, vector<8x896xbf16>
    %c0_1 = arith.constant 0 : index
    %c0_2 = arith.constant 0 : index
    %1 = vector.load %arg2[%c0_1, %c0_2] : memref<896x128xbf16, #tpu.memory_space<vmem>>, vector<896x128xbf16>
    %cst = arith.constant dense<0.000000e+00> : vector<8x128xf32>
    %2 = tpu.matmul %0, %1, %cst {dimension_numbers = #tpu.dot_dimension_numbers<[1], [0], [0], [1], [0, 0, 1, 1], [], []>} : vector<8x896xbf16>, vector<896x128xbf16>, vector<8x128xf32> -> vector<8x128xf32>
    %c0_3 = arith.constant 0 : index
    %c0_4 = arith.constant 0 : index
    %3 = vector.load %arg3[%c0_3, %c0_4] : memref<1x128xf32, #tpu.memory_space<vmem>>, vector<1x128xf32>
    %4 = vector.broadcast %3 : vector<1x128xf32> to vector<8x128xf32>
    %5 = arith.addf %2, %4 : vector<8x128xf32>
    %cst_5 = arith.constant 0.000000e+00 : f32
    %6 = vector.broadcast %cst_5 : f32 to vector<8x128xf32>
    %7 = arith.maximumf %5, %6 : vector<8x128xf32>
    %8 = arith.truncf %7 : vector<8x128xf32> to vector<8x128xbf16>
    %c0_6 = arith.constant 0 : index
    %c0_7 = arith.constant 0 : index
    %9 = vector.load %arg4[%c0_6, %c0_7] : memref<8x128xbf16, #tpu.memory_space<vmem>>, vector<8x128xbf16>
    tpu.vector_store %arg4[%c0_6, %c0_7], %8 {strides = array<i32>} : memref<8x128xbf16, #tpu.memory_space<vmem>>, vector<8x128xbf16>,
    return
  }
  func.func @transform_0(%arg0: i32) -> (i32, i32) {
    %c0_i32 = arith.constant 0 : i32
    %c0_i32_0 = arith.constant 0 : i32
    return %arg0, %c0_i32 : i32, i32
  }
  func.func @transform_1(%arg0: i32) -> (i32, i32) {
    %c0_i32 = arith.constant 0 : i32
    %c0_i32_0 = arith.constant 0 : i32
    %c0_i32_1 = arith.constant 0 : i32
    return %c0_i32, %c0_i32_0 : i32, i32
  }
  func.func @transform_2(%arg0: i32) -> (i32, i32) {
    %c0_i32 = arith.constant 0 : i32
    %c0_i32_0 = arith.constant 0 : i32
    %c0_i32_1 = arith.constant 0 : i32
    return %c0_i32, %c0_i32_0 : i32, i32
  }
  func.func @transform_3(%arg0: i32) -> (i32, i32) {
    %c0_i32 = arith.constant 0 : i32
    %c0_i32_0 = arith.constant 0 : i32
    return %arg0, %c0_i32 : i32, i32
  }
}

module attributes {stable_mosaic.version = 11 : i64} {
  func.func @_maxpool3x3s2_kernel(%arg0: i32, %arg1: i32, %arg2: memref<8x1x4x32xbf16, #tpu.memory_space<vmem>>, %arg3: memref<8x1x4x32xbf16, #tpu.memory_space<vmem>>, %arg4: memref<1x1x4x32xbf16, #tpu.memory_space<vmem>>, %arg5: memref<1x1x4x32xbf16, #tpu.memory_space<vmem>>, %arg6: memref<1x4x4x32xf32, #tpu.memory_space<vmem>>) attributes {dimension_semantics = [#tpu.dimension_semantics<parallel>, #tpu.dimension_semantics<parallel>], iteration_bounds = array<i64: 2, 1>, scalar_prefetch = 0 : i64, scratch_operands = 0 : i64, tpu.core_type = #tpu.core_type<tc>, window_params = [{transform_indices = @transform_0, window_bounds = array<i64: 8, 1, 4, 32>}, {transform_indices = @transform_1, window_bounds = array<i64: 8, 1, 4, 32>}, {transform_indices = @transform_2, window_bounds = array<i64: 1, 1, 4, 32>}, {transform_indices = @transform_3, window_bounds = array<i64: 1, 1, 4, 32>}, {transform_indices = @transform_4, window_bounds = array<i64: 1, 4, 4, 32>}]} {
    %c0 = arith.constant 0 : index
    %c0_0 = arith.constant 0 : index
    %c0_1 = arith.constant 0 : index
    %c0_2 = arith.constant 0 : index
    %0 = vector.load %arg2[%c0, %c0_0, %c0_1, %c0_2] : memref<8x1x4x32xbf16, #tpu.memory_space<vmem>>, vector<8x1x4x32xbf16>
    %1 = vector.shape_cast %0 : vector<8x1x4x32xbf16> to vector<8x4x32xbf16>
    %2 = arith.extf %1 : vector<8x4x32xbf16> to vector<8x4x32xf32>
    %c0_3 = arith.constant 0 : index
    %c0_4 = arith.constant 0 : index
    %c0_5 = arith.constant 0 : index
    %c0_6 = arith.constant 0 : index
    %3 = vector.load %arg3[%c0_3, %c0_4, %c0_5, %c0_6] : memref<8x1x4x32xbf16, #tpu.memory_space<vmem>>, vector<8x1x4x32xbf16>
    %4 = vector.shape_cast %3 : vector<8x1x4x32xbf16> to vector<8x4x32xbf16>
    %5 = arith.extf %4 : vector<8x4x32xbf16> to vector<8x4x32xf32>
    %c0_7 = arith.constant 0 : index
    %c0_8 = arith.constant 0 : index
    %c0_9 = arith.constant 0 : index
    %c0_10 = arith.constant 0 : index
    %6 = vector.load %arg4[%c0_7, %c0_8, %c0_9, %c0_10] : memref<1x1x4x32xbf16, #tpu.memory_space<vmem>>, vector<1x1x4x32xbf16>
    %7 = vector.shape_cast %6 : vector<1x1x4x32xbf16> to vector<4x32xbf16>
    %8 = arith.extf %7 : vector<4x32xbf16> to vector<4x32xf32>
    %c0_11 = arith.constant 0 : index
    %c0_12 = arith.constant 0 : index
    %c0_13 = arith.constant 0 : index
    %c0_14 = arith.constant 0 : index
    %9 = vector.load %arg5[%c0_11, %c0_12, %c0_13, %c0_14] : memref<1x1x4x32xbf16, #tpu.memory_space<vmem>>, vector<1x1x4x32xbf16>
    %10 = vector.shape_cast %9 : vector<1x1x4x32xbf16> to vector<4x32xbf16>
    %11 = arith.extf %10 : vector<4x32xbf16> to vector<4x32xf32>
    %12 = vector.extract_strided_slice %5 {offsets = [0, 0, 0], sizes = [8, 1, 32], strides = [1, 1, 1]} : vector<8x4x32xf32> to vector<8x1x32xf32>
    %13 = vector.extract_strided_slice %5 {offsets = [0, 0, 0], sizes = [8, 3, 32], strides = [1, 1, 1]} : vector<8x4x32xf32> to vector<8x3x32xf32>
    %14 = tpu.concatenate %12, %13 in 1 : vector<8x1x32xf32>, vector<8x3x32xf32> -> vector<8x4x32xf32>
    %15 = vector.extract_strided_slice %11 {offsets = [0, 0], sizes = [1, 32], strides = [1, 1]} : vector<4x32xf32> to vector<1x32xf32>
    %16 = vector.extract_strided_slice %11 {offsets = [0, 0], sizes = [3, 32], strides = [1, 1]} : vector<4x32xf32> to vector<3x32xf32>
    %17 = tpu.concatenate %15, %16 in 0 : vector<1x32xf32>, vector<3x32xf32> -> vector<4x32xf32>
    %18 = arith.maximumf %2, %5 : vector<8x4x32xf32>
    %19 = arith.maximumf %18, %14 : vector<8x4x32xf32>
    %20 = arith.maximumf %8, %11 : vector<4x32xf32>
    %21 = arith.maximumf %20, %17 : vector<4x32xf32>
    %22 = vector.shape_cast %21 : vector<4x32xf32> to vector<1x4x32xf32>
    %23 = tpu.concatenate %22, %19 in 0 : vector<1x4x32xf32>, vector<8x4x32xf32> -> vector<9x4x32xf32>
    %24 = vector.extract_strided_slice %23 {offsets = [0, 0, 0], sizes = [1, 4, 32], strides = [1, 1, 1]} : vector<9x4x32xf32> to vector<1x4x32xf32>
    %25 = vector.shape_cast %24 : vector<1x4x32xf32> to vector<4x32xf32>
    %26 = vector.extract_strided_slice %23 {offsets = [1, 0, 0], sizes = [1, 4, 32], strides = [1, 1, 1]} : vector<9x4x32xf32> to vector<1x4x32xf32>
    %27 = vector.shape_cast %26 : vector<1x4x32xf32> to vector<4x32xf32>
    %28 = arith.maximumf %25, %27 : vector<4x32xf32>
    %29 = vector.extract_strided_slice %23 {offsets = [2, 0, 0], sizes = [1, 4, 32], strides = [1, 1, 1]} : vector<9x4x32xf32> to vector<1x4x32xf32>
    %30 = vector.shape_cast %29 : vector<1x4x32xf32> to vector<4x32xf32>
    %31 = arith.maximumf %28, %30 : vector<4x32xf32>
    %c0_15 = arith.constant 0 : index
    %c0_16 = arith.constant 0 : index
    %c0_17 = arith.constant 0 : index
    %c0_18 = arith.constant 0 : index
    %32 = vector.load %arg6[%c0_15, %c0_16, %c0_17, %c0_18] : memref<1x4x4x32xf32, #tpu.memory_space<vmem>>, vector<1x1x4x32xf32>
    %33 = vector.shape_cast %32 : vector<1x1x4x32xf32> to vector<4x32xf32>
    %34 = vector.shape_cast %31 : vector<4x32xf32> to vector<1x1x4x32xf32>
    tpu.vector_store %arg6[%c0_15, %c0_16, %c0_17, %c0_18], %34 {strides = array<i32>} : memref<1x4x4x32xf32, #tpu.memory_space<vmem>>, vector<1x1x4x32xf32>,
    %35 = vector.extract_strided_slice %23 {offsets = [2, 0, 0], sizes = [1, 4, 32], strides = [1, 1, 1]} : vector<9x4x32xf32> to vector<1x4x32xf32>
    %36 = vector.shape_cast %35 : vector<1x4x32xf32> to vector<4x32xf32>
    %37 = vector.extract_strided_slice %23 {offsets = [3, 0, 0], sizes = [1, 4, 32], strides = [1, 1, 1]} : vector<9x4x32xf32> to vector<1x4x32xf32>
    %38 = vector.shape_cast %37 : vector<1x4x32xf32> to vector<4x32xf32>
    %39 = arith.maximumf %36, %38 : vector<4x32xf32>
    %40 = vector.extract_strided_slice %23 {offsets = [4, 0, 0], sizes = [1, 4, 32], strides = [1, 1, 1]} : vector<9x4x32xf32> to vector<1x4x32xf32>
    %41 = vector.shape_cast %40 : vector<1x4x32xf32> to vector<4x32xf32>
    %42 = arith.maximumf %39, %41 : vector<4x32xf32>
    %c0_19 = arith.constant 0 : index
    %c1 = arith.constant 1 : index
    %c0_20 = arith.constant 0 : index
    %c0_21 = arith.constant 0 : index
    %43 = vector.load %arg6[%c0_19, %c1, %c0_20, %c0_21] : memref<1x4x4x32xf32, #tpu.memory_space<vmem>>, vector<1x1x4x32xf32>
    %44 = vector.shape_cast %43 : vector<1x1x4x32xf32> to vector<4x32xf32>
    %45 = vector.shape_cast %42 : vector<4x32xf32> to vector<1x1x4x32xf32>
    tpu.vector_store %arg6[%c0_19, %c1, %c0_20, %c0_21], %45 {strides = array<i32>} : memref<1x4x4x32xf32, #tpu.memory_space<vmem>>, vector<1x1x4x32xf32>,
    %46 = vector.extract_strided_slice %23 {offsets = [4, 0, 0], sizes = [1, 4, 32], strides = [1, 1, 1]} : vector<9x4x32xf32> to vector<1x4x32xf32>
    %47 = vector.shape_cast %46 : vector<1x4x32xf32> to vector<4x32xf32>
    %48 = vector.extract_strided_slice %23 {offsets = [5, 0, 0], sizes = [1, 4, 32], strides = [1, 1, 1]} : vector<9x4x32xf32> to vector<1x4x32xf32>
    %49 = vector.shape_cast %48 : vector<1x4x32xf32> to vector<4x32xf32>
    %50 = arith.maximumf %47, %49 : vector<4x32xf32>
    %51 = vector.extract_strided_slice %23 {offsets = [6, 0, 0], sizes = [1, 4, 32], strides = [1, 1, 1]} : vector<9x4x32xf32> to vector<1x4x32xf32>
    %52 = vector.shape_cast %51 : vector<1x4x32xf32> to vector<4x32xf32>
    %53 = arith.maximumf %50, %52 : vector<4x32xf32>
    %c0_22 = arith.constant 0 : index
    %c2 = arith.constant 2 : index
    %c0_23 = arith.constant 0 : index
    %c0_24 = arith.constant 0 : index
    %54 = vector.load %arg6[%c0_22, %c2, %c0_23, %c0_24] : memref<1x4x4x32xf32, #tpu.memory_space<vmem>>, vector<1x1x4x32xf32>
    %55 = vector.shape_cast %54 : vector<1x1x4x32xf32> to vector<4x32xf32>
    %56 = vector.shape_cast %53 : vector<4x32xf32> to vector<1x1x4x32xf32>
    tpu.vector_store %arg6[%c0_22, %c2, %c0_23, %c0_24], %56 {strides = array<i32>} : memref<1x4x4x32xf32, #tpu.memory_space<vmem>>, vector<1x1x4x32xf32>,
    %57 = vector.extract_strided_slice %23 {offsets = [6, 0, 0], sizes = [1, 4, 32], strides = [1, 1, 1]} : vector<9x4x32xf32> to vector<1x4x32xf32>
    %58 = vector.shape_cast %57 : vector<1x4x32xf32> to vector<4x32xf32>
    %59 = vector.extract_strided_slice %23 {offsets = [7, 0, 0], sizes = [1, 4, 32], strides = [1, 1, 1]} : vector<9x4x32xf32> to vector<1x4x32xf32>
    %60 = vector.shape_cast %59 : vector<1x4x32xf32> to vector<4x32xf32>
    %61 = arith.maximumf %58, %60 : vector<4x32xf32>
    %62 = vector.extract_strided_slice %23 {offsets = [8, 0, 0], sizes = [1, 4, 32], strides = [1, 1, 1]} : vector<9x4x32xf32> to vector<1x4x32xf32>
    %63 = vector.shape_cast %62 : vector<1x4x32xf32> to vector<4x32xf32>
    %64 = arith.maximumf %61, %63 : vector<4x32xf32>
    %c0_25 = arith.constant 0 : index
    %c3 = arith.constant 3 : index
    %c0_26 = arith.constant 0 : index
    %c0_27 = arith.constant 0 : index
    %65 = vector.load %arg6[%c0_25, %c3, %c0_26, %c0_27] : memref<1x4x4x32xf32, #tpu.memory_space<vmem>>, vector<1x1x4x32xf32>
    %66 = vector.shape_cast %65 : vector<1x1x4x32xf32> to vector<4x32xf32>
    %67 = vector.shape_cast %64 : vector<4x32xf32> to vector<1x1x4x32xf32>
    tpu.vector_store %arg6[%c0_25, %c3, %c0_26, %c0_27], %67 {strides = array<i32>} : memref<1x4x4x32xf32, #tpu.memory_space<vmem>>, vector<1x1x4x32xf32>,
    return
  }
  func.func @transform_0(%arg0: i32, %arg1: i32) -> (i32, i32, i32, i32) {
    %c1_i32 = arith.constant 1 : i32
    %0 = arith.muli %arg0, %c1_i32 : i32
    %1 = arith.addi %0, %arg1 : i32
    %c0_i32 = arith.constant 0 : i32
    %c0_i32_0 = arith.constant 0 : i32
    %c0_i32_1 = arith.constant 0 : i32
    %c0_i32_2 = arith.constant 0 : i32
    return %1, %c0_i32, %c0_i32_0, %c0_i32_1 : i32, i32, i32, i32
  }
  func.func @transform_1(%arg0: i32, %arg1: i32) -> (i32, i32, i32, i32) {
    %c1_i32 = arith.constant 1 : i32
    %0 = arith.muli %arg0, %c1_i32 : i32
    %1 = arith.addi %0, %arg1 : i32
    %c1_i32_0 = arith.constant 1 : i32
    %c0_i32 = arith.constant 0 : i32
    %c0_i32_1 = arith.constant 0 : i32
    %c0_i32_2 = arith.constant 0 : i32
    return %1, %c1_i32_0, %c0_i32, %c0_i32_1 : i32, i32, i32, i32
  }
  func.func @transform_2(%arg0: i32, %arg1: i32) -> (i32, i32, i32, i32) {
    %c8_i32 = arith.constant 8 : i32
    %0 = arith.muli %arg0, %c8_i32 : i32
    %c8_i32_0 = arith.constant 8 : i32
    %1 = arith.muli %c8_i32_0, %arg1 : i32
    %2 = arith.addi %0, %1 : i32
    %c1_i32 = arith.constant 1 : i32
    %3 = arith.subi %2, %c1_i32 : i32
    %c8_i32_1 = arith.constant 8 : i32
    %4 = arith.muli %arg0, %c8_i32_1 : i32
    %5 = arith.maxsi %3, %4 : i32
    %c0_i32 = arith.constant 0 : i32
    %c0_i32_2 = arith.constant 0 : i32
    %c0_i32_3 = arith.constant 0 : i32
    %c0_i32_4 = arith.constant 0 : i32
    return %5, %c0_i32, %c0_i32_2, %c0_i32_3 : i32, i32, i32, i32
  }
  func.func @transform_3(%arg0: i32, %arg1: i32) -> (i32, i32, i32, i32) {
    %c8_i32 = arith.constant 8 : i32
    %0 = arith.muli %arg0, %c8_i32 : i32
    %c8_i32_0 = arith.constant 8 : i32
    %1 = arith.muli %c8_i32_0, %arg1 : i32
    %2 = arith.addi %0, %1 : i32
    %c1_i32 = arith.constant 1 : i32
    %3 = arith.subi %2, %c1_i32 : i32
    %c8_i32_1 = arith.constant 8 : i32
    %4 = arith.muli %arg0, %c8_i32_1 : i32
    %5 = arith.maxsi %3, %4 : i32
    %c1_i32_2 = arith.constant 1 : i32
    %c0_i32 = arith.constant 0 : i32
    %c0_i32_3 = arith.constant 0 : i32
    %c0_i32_4 = arith.constant 0 : i32
    return %5, %c1_i32_2, %c0_i32, %c0_i32_3 : i32, i32, i32, i32
  }
  func.func @transform_4(%arg0: i32, %arg1: i32) -> (i32, i32, i32, i32) {
    %c0_i32 = arith.constant 0 : i32
    %c0_i32_0 = arith.constant 0 : i32
    %c0_i32_1 = arith.constant 0 : i32
    return %arg0, %arg1, %c0_i32, %c0_i32_0 : i32, i32, i32, i32
  }
}

</mosaic_0001>

<llo_original>
// kernel: tile.8
$region0: #{tile.8}
  #allocation0 [shape = 's32[1]{0}', space=sflag, size = 0x4, scoped, tag = 'scoped memory for tile.8']
  %s0 = inlined_call_operand.vmem [shape: f32[32], index: 0, kind: input, shape index: {}]
  %s1 = inlined_call_operand.vmem [shape: f32[4,32], index: 1, kind: output, shape index: {}]
  // Predicated region
  $region2: #{tile.8} parent=0 // pred_check
    _
  $region3: #{tile.8} parent=0 // pred_check_branch
    %3 = sbr.rel (0) target = $region5
  $region4: #{tile.8} parent=0 // pred_region
    _
  $region5: #{tile.8} parent=0 // pred_fallthru
    _
  %v4 = vld [vmem:[%s0] ss:$0 sm:$0xff]
  %5 = vst [vmem:[%s1] sm:$0xf] %v4

// kernel: tile.9
$region0: #{tile.9}
  %s0 = inlined_call_operand.vmem [shape: f32[4,32], index: 0, kind: input, shape index: {}]
  %s1 = inlined_call_operand.vmem [shape: f32[1,128], index: 1, kind: output, shape index: {}]
  $region1: #{tile.9} parent=0
    #allocation0 [shape = 'u8[4096]{0}', space=vmem, size = 0x1000, scoped, tag = 'scoped mem for output reshape']
    #allocation1 [shape = 'u8[4096]{0}', space=vmem, size = 0x1000, scoped, tag = 'scoped mem for input reshape']
    %s3 = sshllo.u32 0, 4
    %v4 = vld [vmem:[%s0] sm:%s3]
    %5 = vst [vmem:[#allocation1] sm:%s3] %v4
    %v6 = vld [vmem:[#allocation1] sm:$0x1]
    %vm7 = vcmask 261120
    %8 = vst.msk [vmem:[#allocation0] sm:$0x1] %vm7, %v6
    %s9 = scalar_lea.vmem [#allocation1], 3
    %v10 = vld [vmem:[%s9] sm:$0x1]
    %11 = vrot.lane.b32.xlu0 %v10, 96
    %v12 = vpop.permute.xlu0 %11
    %vm13 = vcmask 1048320
    %14 = vst.msk [vmem:[#allocation0] sm:$0x1] %vm13, %v12
    %s15 = scalar_lea.vmem [#allocation1], 2
    %v16 = vld [vmem:[%s15] sm:$0x1]
    %17 = vrot.lane.b32.xlu0 %v16, 64
    %v18 = vpop.permute.xlu0 %17
    %vm19 = vcmask 785920
    %20 = vst.msk [vmem:[#allocation0] sm:$0x1] %vm19, %v18
    %s21 = scalar_lea.vmem [#allocation1], 1
    %v22 = vld [vmem:[%s21] sm:$0x1]
    %23 = vrot.lane.b32.xlu0 %v22, 32
    %v24 = vpop.permute.xlu0 %23
    %vm25 = vcmask 523520
    %26 = vst.msk [vmem:[#allocation0] sm:$0x1] %vm25, %v24
    %s28 = sshllo.u32 0, 1
    %v30 = vld [vmem:[#allocation0] sm:%s28]
    %s31 = sshllo.u32 0, 1
    %32 = vst [vmem:[%s1] sm:%s31] %v30

// kernel: res_init_block_forward.3
$region0: #{res_init_block_forward.3}
  #allocation0 [shape = 'u32[]', space=smem, size = 0x4, offset = 0x4, fixed_abs, tag = 'smem constant byte address 0x4 - core index']
  #allocation1 [shape = 'u32[144,128]{1,0:T(1,128)}', space=vmem, size = 0x12000, scoped, tag = 'internal scratch']
  %s0 = inlined_call_operand.vmem [shape: bf16[16,2,4,32], index: 0, kind: input, shape index: {}, may-alias: {0,1,2,3}]
  %s1 = inlined_call_operand.vmem [shape: bf16[16,2,4,32], index: 1, kind: input, shape index: {}, may-alias: {0,1,2,3}]
  %s2 = inlined_call_operand.vmem [shape: bf16[16,2,4,32], index: 2, kind: input, shape index: {}, may-alias: {0,1,2,3}]
  %s3 = inlined_call_operand.vmem [shape: bf16[16,2,4,32], index: 3, kind: input, shape index: {}, may-alias: {0,1,2,3}]
  %s4 = inlined_call_operand.hbm [shape: f32[2,4,4,32], index: 4, kind: output, shape index: {}]
  %s5 = sld [smem:[#allocation0]]
  $region131: #{res_init_block_forward.3} parent=0
    _
  %s7 = ssub.s32 1, %s5
  %s8 = scalar_select 0, %s7, %s5
  $region1: #{res_init_block_forward.3} parent=0
    #allocation2 [shape = 'u8[16384]{0}', space=vmem, size = 0x4000, scoped, tag = 'input window, operand 0']
    #allocation3 [shape = 'u8[16384]{0}', space=vmem, size = 0x4000, scoped, tag = 'input window, operand 1']
    #allocation4 [shape = 'u8[16384]{0}', space=vmem, size = 0x4000, scoped, tag = 'output window, operand 0']
    #allocation5 [shape = 's32[2]{0}', space=sflag, size = 0x8, scoped, tag = 'scoped memory for res_init_block_forward.3']
    %9 = vsyncpa [#allocation5], 0
    %s10 = scalar_lea.sflag [#allocation5], 1
    %11 = vsyncpa %s10, 0
    loop: start=0, step=1, limit=4
    $region2: #{res_init_block_forward.3} parent=1 // loop_pre_header
      _
    $region3: #{res_init_block_forward.3} parent=1 // loop_header
      %s13 = sphi 0, %s17
      %p14 = scmp.ge.s32.totalorder %s13, 4
      %s20 = sphi 0, %s32
      %s21 = sphi 0, %s28
      %s22 = sphi 0, %s20
      %s23 = sphi 0, %s21
      %s24 = sphi 0, %s22
      %s25 = sphi 0, %s23
      %s37 = sphi 0, %s39
      %s40 = sphi 0, %s37
      %s41 = sphi 0, %s40
      %s57 = sphi 0, %s41
      %s65 = sphi 0, %s67
      %s68 = sphi 0, %s65
      %s69 = sphi 0, %s68
      %s85 = sphi 0, %s69
      %s103 = sphi 0, %s105
      %s106 = sphi 0, %s103
      %s107 = sphi 0, %s106
      %s123 = sphi 0, %s107
      %s141 = sphi 0, %s143
      %s144 = sphi 0, %s141
      %s145 = sphi 0, %s144
      %s161 = sphi 0, %s145
      %s169 = sphi 0, %s171
      %s172 = sphi 0, %s169
      %s173 = sphi 0, %s172
      %s189 = sphi 0, %s173
    $region4: #{res_init_block_forward.3} parent=1 // loop_header_branch
      %16 = sbr.rel (%p14) target = $region8
    $region5: #{res_init_block_forward.3} parent=1 // loop_body
      %s18 = ssub.s32 %s13, 1
      %s19 = ssub.s32 %s13, 2
      %s26 = sadd.s32 1, %s21
      %p27 = scmp.ge.s32.totalorder %s26, 1
      %s28 = scalar_select %p27, 0, %s26
      %s29 = sadd.s32 1, %s20
      %s30 = scalar_select %p27, %s29, %s20
      %p31 = scmp.ge.s32.totalorder %s30, 2
      %s32 = scalar_select %p31, 0, %s30
      %s33 = sadd.s32 %s20, %s21
      %s34 = sadd.s32 %s32, %s28
      %s35 = ssub.s32 %s33, %s34
      %p36 = scmp.eq.s32.totalorder %s35, 0
      %s38 = sadd.s32 %s37, 1
      %s39 = scalar_select %p36, %s37, %s38
      %p42 = pneg %p36
      %p43 = scmp.eq.s32.totalorder %s13, 1
      %p44 = por %p42, %p43
      %p45 = scmp.ne.s32.totalorder %s37, %s40
      %p46 = scmp.eq.s32.totalorder %s13, 0
      %p47 = por %p45, %p46
      %p48 = scmp.ne.s32.totalorder %s37, %s40
      %p49 = scmp.eq.s32.totalorder %s18, 1
      %p50 = por %p48, %p49
      %p51 = scmp.ne.s32.totalorder %s40, %s41
      %p52 = scmp.eq.s32.totalorder %s18, 0
      %p53 = por %p51, %p52
      %p54 = scmp.ne.s32.totalorder %s40, %s41
      %p55 = scmp.eq.s32.totalorder %s19, 1
      %p56 = por %p54, %p55
      %p58 = scmp.ne.s32.totalorder %s41, %s57
      %p59 = scmp.eq.s32.totalorder %s19, 0
      %p60 = por %p58, %p59
      %s61 = sadd.s32 %s20, %s21
      %s62 = sadd.s32 %s32, %s28
      %s63 = ssub.s32 %s61, %s62
      %p64 = scmp.eq.s32.totalorder %s63, 0
      %s66 = sadd.s32 %s65, 1
      %s67 = scalar_select %p64, %s65, %s66
      %p70 = pneg %p64
      %p71 = scmp.eq.s32.totalorder %s13, 1
      %p72 = por %p70, %p71
      %p73 = scmp.ne.s32.totalorder %s65, %s68
      %p74 = scmp.eq.s32.totalorder %s13, 0
      %p75 = por %p73, %p74
      %p76 = scmp.ne.s32.totalorder %s65, %s68
      %p77 = scmp.eq.s32.totalorder %s18, 1
      %p78 = por %p76, %p77
      %p79 = scmp.ne.s32.totalorder %s68, %s69
      %p80 = scmp.eq.s32.totalorder %s18, 0
      %p81 = por %p79, %p80
      %p82 = scmp.ne.s32.totalorder %s68, %s69
      %p83 = scmp.eq.s32.totalorder %s19, 1
      %p84 = por %p82, %p83
      %p86 = scmp.ne.s32.totalorder %s69, %s85
      %p87 = scmp.eq.s32.totalorder %s19, 0
      %p88 = por %p86, %p87
      %s89 = smul.u32 %s20, 8
      %s90 = smul.u32 %s21, 8
      %s91 = sadd.s32 %s89, %s90
      %s92 = ssub.s32 %s91, 1
      %p93 = scmp.gt.s32.totalorder %s92, %s89
      %s94 = scalar_select %p93, %s92, %s89
      %s95 = smul.u32 %s32, 8
      %s96 = smul.u32 %s28, 8
      %s97 = sadd.s32 %s95, %s96
      %s98 = ssub.s32 %s97, 1
      %p99 = scmp.gt.s32.totalorder %s98, %s95
      %s100 = scalar_select %p99, %s98, %s95
      %s101 = ssub.s32 %s94, %s100
      %p102 = scmp.eq.s32.totalorder %s101, 0
      %s104 = sadd.s32 %s103, 1
      %s105 = scalar_select %p102, %s103, %s104
      %p108 = pneg %p102
      %p109 = scmp.eq.s32.totalorder %s13, 1
      %p110 = por %p108, %p109
      %p111 = scmp.ne.s32.totalorder %s103, %s106
      %p112 = scmp.eq.s32.totalorder %s13, 0
      %p113 = por %p111, %p112
      %p114 = scmp.ne.s32.totalorder %s103, %s106
      %p115 = scmp.eq.s32.totalorder %s18, 1
      %p116 = por %p114, %p115
      %p117 = scmp.ne.s32.totalorder %s106, %s107
      %p118 = scmp.eq.s32.totalorder %s18, 0
      %p119 = por %p117, %p118
      %p120 = scmp.ne.s32.totalorder %s106, %s107
      %p121 = scmp.eq.s32.totalorder %s19, 1
      %p122 = por %p120, %p121
      %p124 = scmp.ne.s32.totalorder %s107, %s123
      %p125 = scmp.eq.s32.totalorder %s19, 0
      %p126 = por %p124, %p125
      %s127 = smul.u32 %s20, 8
      %s128 = smul.u32 %s21, 8
      %s129 = sadd.s32 %s127, %s128
      %s130 = ssub.s32 %s129, 1
      %p131 = scmp.gt.s32.totalorder %s130, %s127
      %s132 = scalar_select %p131, %s130, %s127
      %s133 = smul.u32 %s32, 8
      %s134 = smul.u32 %s28, 8
      %s135 = sadd.s32 %s133, %s134
      %s136 = ssub.s32 %s135, 1
      %p137 = scmp.gt.s32.totalorder %s136, %s133
      %s138 = scalar_select %p137, %s136, %s133
      %s139 = ssub.s32 %s132, %s138
      %p140 = scmp.eq.s32.totalorder %s139, 0
      %s142 = sadd.s32 %s141, 1
      %s143 = scalar_select %p140, %s141, %s142
      %p146 = pneg %p140
      %p147 = scmp.eq.s32.totalorder %s13, 1
      %p148 = por %p146, %p147
      %p149 = scmp.ne.s32.totalorder %s141, %s144
      %p150 = scmp.eq.s32.totalorder %s13, 0
      %p151 = por %p149, %p150
      %p152 = scmp.ne.s32.totalorder %s141, %s144
      %p153 = scmp.eq.s32.totalorder %s18, 1
      %p154 = por %p152, %p153
      %p155 = scmp.ne.s32.totalorder %s144, %s145
      %p156 = scmp.eq.s32.totalorder %s18, 0
      %p157 = por %p155, %p156
      %p158 = scmp.ne.s32.totalorder %s144, %s145
      %p159 = scmp.eq.s32.totalorder %s19, 1
      %p160 = por %p158, %p159
      %p162 = scmp.ne.s32.totalorder %s145, %s161
      %p163 = scmp.eq.s32.totalorder %s19, 0
      %p164 = por %p162, %p163
      %s165 = ssub.s32 %s20, %s32
      %s166 = ssub.s32 %s21, %s28
      %s167 = sor.u32 %s165, %s166
      %p168 = scmp.eq.s32.totalorder %s167, 0
      %s170 = sadd.s32 %s169, 1
      %s171 = scalar_select %p168, %s169, %s170
      %p174 = pneg %p168
      %p175 = scmp.eq.s32.totalorder %s13, 1
      %p176 = por %p174, %p175
      %p177 = scmp.ne.s32.totalorder %s169, %s172
      %p178 = scmp.eq.s32.totalorder %s13, 0
      %p179 = por %p177, %p178
      %p180 = scmp.ne.s32.totalorder %s169, %s172
      %p181 = scmp.eq.s32.totalorder %s18, 1
      %p182 = por %p180, %p181
      %p183 = scmp.ne.s32.totalorder %s172, %s173
      %p184 = scmp.eq.s32.totalorder %s18, 0
      %p185 = por %p183, %p184
      %p186 = scmp.ne.s32.totalorder %s172, %s173
      %p187 = scmp.eq.s32.totalorder %s19, 1
      %p188 = por %p186, %p187
      %p190 = scmp.ne.s32.totalorder %s173, %s189
      %p191 = scmp.eq.s32.totalorder %s19, 0
      %p192 = por %p190, %p191
      %p193 = scmp.le.s32.totalorder 1, %s13
      %p194 = scmp.lt.s32.totalorder %s13, 3
      %p195 = pnand %p193, %p194
      %p196 = pneg %p195
      // Predicated region
      $region9: #{res_init_block_forward.3} parent=5 // pred_check
        _
      $region10: #{res_init_block_forward.3} parent=5 // pred_check_branch
        %198 = sbr.rel (%p195) target = $region12
      $region11: #{res_init_block_forward.3} parent=5 // pred_region
        %s199 = ssub.s32 %s13, 1
      $region12: #{res_init_block_forward.3} parent=5 // pred_fallthru
        _
      %p200 = scmp.lt.s32.totalorder %s13, 2
      // Predicated region
      $region13: #{res_init_block_forward.3} parent=5 // pred_check
        %p201 = pneg %p200
      $region14: #{res_init_block_forward.3} parent=5 // pred_check_branch
        %203 = sbr.rel (%p201) target = $region16
      $region15: #{res_init_block_forward.3} parent=5 // pred_region
        // Predicated region
        $region17: #{res_init_block_forward.3} parent=15 // pred_check
          %p204 = pneg %p47
        $region18: #{res_init_block_forward.3} parent=15 // pred_check_branch
          %206 = sbr.rel (%p204) target = $region20
        $region19: #{res_init_block_forward.3} parent=15 // pred_region
          %s207 = sand.u32 %s37, 1
          %s208 = sand.u32 %s37, 1
          %s209 = smul.addr %s208, 16
          %s210 = scalar_lea.vmem [#allocation2], %s209
          %s211 = sadd.s32 %s20, %s21
          %s212 = smul.u32 8, %s211
          %s213 = smul.addr %s212, 2
          %s214 = smul.addr %s213, 2
          %s215 = scalar_lea.vmem %s0, %s214
          // Predicated region
          $region21: #{res_init_block_forward.3} parent=19 // pred_check
            _
          $region22: #{res_init_block_forward.3} parent=19 // pred_check_branch
            %217 = sbr.rel (0) target = $region24
          $region23: #{res_init_block_forward.3} parent=19 // pred_region
            // Predicated region
            $region25: #{res_init_block_forward.3} parent=23 // pred_check
              _
            $region26: #{res_init_block_forward.3} parent=23 // pred_check_branch
              %219 = sbr.rel target = $region28
            $region27: #{res_init_block_forward.3} parent=23 // pred_region
              // Predicated region
              $region40: #{res_init_block_forward.3} parent=27 // pred_check
                _
              $region41: #{res_init_block_forward.3} parent=27 // pred_check_branch
                %248 = sbr.rel (0) target = $region43
              $region42: #{res_init_block_forward.3} parent=27 // pred_region
                loop: start=0, step=1, limit=1
                $region44: #{res_init_block_forward.3} parent=42 // loop_pre_header
                  _
                $region45: #{res_init_block_forward.3} parent=42 // loop_header
                  %s250 = sphi 0, %s254
                  %p251 = scmp.ge.s32.totalorder %s250, 1
                  %s255 = sphi %s215, %s215
                  %s256 = sphi %s210, %s210
                $region46: #{res_init_block_forward.3} parent=42 // loop_header_branch
                  %253 = sbr.rel (%p251) target = $region50
                $region47: #{res_init_block_forward.3} parent=42 // loop_body
                  _
                $region48: #{res_init_block_forward.3} parent=42 // loop_footer
                  %s254 = sadd.s32 1, %s250
                $region49: #{res_init_block_forward.3} parent=42 // loop_footer_branch
                  %249 = sbr.rel target = $region45
                $region50: #{res_init_block_forward.3} parent=42 // loop_exit
                  _
                loop: start=0, step=1, limit=1
                $region51: #{res_init_block_forward.3} parent=42 // loop_pre_header
                  _
                $region52: #{res_init_block_forward.3} parent=42 // loop_header
                  %s259 = sphi 0, %s263
                  %p260 = scmp.ge.s32.totalorder %s259, 1
                  %s264 = sphi %s215, %s215
                  %s265 = sphi %s210, %s210
                $region53: #{res_init_block_forward.3} parent=42 // loop_header_branch
                  %262 = sbr.rel (%p260) target = $region57
                $region54: #{res_init_block_forward.3} parent=42 // loop_body
                  %v266 = vld [vmem:[%s264] sm:$0x3]
                  %267 = vst [vmem:[%s265] sm:$0x3] %v266
                  %v268 = vld [vmem:[%s264 + $0x4] sm:$0x3]
                  %269 = vst [vmem:[%s265 + $0x2] sm:$0x3] %v268
                  %v270 = vld [vmem:[%s264 + $0x8] sm:$0x3]
                  %271 = vst [vmem:[%s265 + $0x4] sm:$0x3] %v270
                  %v272 = vld [vmem:[%s264 + $0xc] sm:$0x3]
                  %273 = vst [vmem:[%s265 + $0x6] sm:$0x3] %v272
                  %v274 = vld [vmem:[%s264 + $0x10] sm:$0x3]
                  %275 = vst [vmem:[%s265 + $0x8] sm:$0x3] %v274
                  %v276 = vld [vmem:[%s264 + $0x14] sm:$0x3]
                  %277 = vst [vmem:[%s265 + $0xa] sm:$0x3] %v276
                  %v278 = vld [vmem:[%s264 + $0x18] sm:$0x3]
                  %279 = vst [vmem:[%s265 + $0xc] sm:$0x3] %v278
                  %v280 = vld [vmem:[%s264 + $0x1c] sm:$0x3]
                  %281 = vst [vmem:[%s265 + $0xe] sm:$0x3] %v280
                $region55: #{res_init_block_forward.3} parent=42 // loop_footer
                  %s263 = sadd.s32 1, %s259
                $region56: #{res_init_block_forward.3} parent=42 // loop_footer_branch
                  %258 = sbr.rel target = $region52
                $region57: #{res_init_block_forward.3} parent=42 // loop_exit
                  _
              $region43: #{res_init_block_forward.3} parent=27 // pred_fallthru
                _
            $region28: #{res_init_block_forward.3} parent=23 // pred_fallthru
              _
            // Predicated region
            $region29: #{res_init_block_forward.3} parent=23 // pred_check
              _
            $region30: #{res_init_block_forward.3} parent=23 // pred_check_branch
              %221 = sbr.rel (0) target = $region32
            $region31: #{res_init_block_forward.3} parent=23 // pred_region
              loop: start=0, step=1, limit=1
              $region33: #{res_init_block_forward.3} parent=31 // loop_pre_header
                _
              $region34: #{res_init_block_forward.3} parent=31 // loop_header
                %s224 = sphi 0, %s228
                %p225 = scmp.ge.s32.totalorder %s224, 1
                %s229 = sphi %s215, %s215
                %s230 = sphi %s210, %s210
              $region35: #{res_init_block_forward.3} parent=31 // loop_header_branch
                %227 = sbr.rel (%p225) target = $region39
              $region36: #{res_init_block_forward.3} parent=31 // loop_body
                %v231 = vld [vmem:[%s229] sm:$0x3]
                %232 = vst [vmem:[%s230] sm:$0x3] %v231
                %v233 = vld [vmem:[%s229 + $0x4] sm:$0x3]
                %234 = vst [vmem:[%s230 + $0x2] sm:$0x3] %v233
                %v235 = vld [vmem:[%s229 + $0x8] sm:$0x3]
                %236 = vst [vmem:[%s230 + $0x4] sm:$0x3] %v235
                %v237 = vld [vmem:[%s229 + $0xc] sm:$0x3]
                %238 = vst [vmem:[%s230 + $0x6] sm:$0x3] %v237
                %v239 = vld [vmem:[%s229 + $0x10] sm:$0x3]
                %240 = vst [vmem:[%s230 + $0x8] sm:$0x3] %v239
                %v241 = vld [vmem:[%s229 + $0x14] sm:$0x3]
                %242 = vst [vmem:[%s230 + $0xa] sm:$0x3] %v241
                %v243 = vld [vmem:[%s229 + $0x18] sm:$0x3]
                %244 = vst [vmem:[%s230 + $0xc] sm:$0x3] %v243
                %v245 = vld [vmem:[%s229 + $0x1c] sm:$0x3]
                %246 = vst [vmem:[%s230 + $0xe] sm:$0x3] %v245
              $region37: #{res_init_block_forward.3} parent=31 // loop_footer
                %s228 = sadd.s32 1, %s224
              $region38: #{res_init_block_forward.3} parent=31 // loop_footer_branch
                %223 = sbr.rel target = $region34
              $region39: #{res_init_block_forward.3} parent=31 // loop_exit
                _
            $region32: #{res_init_block_forward.3} parent=23 // pred_fallthru
              _
          $region24: #{res_init_block_forward.3} parent=19 // pred_fallthru
            _
          %282 = vnop
        $region20: #{res_init_block_forward.3} parent=15 // pred_fallthru
          _
        // Predicated region
        $region58: #{res_init_block_forward.3} parent=15 // pred_check
          %p283 = pneg %p75
        $region59: #{res_init_block_forward.3} parent=15 // pred_check_branch
          %285 = sbr.rel (%p283) target = $region61
        $region60: #{res_init_block_forward.3} parent=15 // pred_region
          %s286 = sand.u32 %s65, 1
          %s287 = sand.u32 %s65, 1
          %s288 = smul.addr %s287, 16
          %s289 = scalar_lea.vmem [#allocation3], %s288
          %s290 = sadd.s32 %s20, %s21
          %s291 = smul.u32 8, %s290
          %s292 = smul.addr %s291, 2
          %s293 = sadd.s32 1, %s292
          %s294 = smul.addr %s293, 2
          %s295 = scalar_lea.vmem %s1, %s294
          // Predicated region
          $region62: #{res_init_block_forward.3} parent=60 // pred_check
            _
          $region63: #{res_init_block_forward.3} parent=60 // pred_check_branch
            %297 = sbr.rel (0) target = $region65
          $region64: #{res_init_block_forward.3} parent=60 // pred_region
            // Predicated region
            $region66: #{res_init_block_forward.3} parent=64 // pred_check
              _
            $region67: #{res_init_block_forward.3} parent=64 // pred_check_branch
              %299 = sbr.rel target = $region69
            $region68: #{res_init_block_forward.3} parent=64 // pred_region
              // Predicated region
              $region81: #{res_init_block_forward.3} parent=68 // pred_check
                _
              $region82: #{res_init_block_forward.3} parent=68 // pred_check_branch
                %328 = sbr.rel (0) target = $region84
              $region83: #{res_init_block_forward.3} parent=68 // pred_region
                loop: start=0, step=1, limit=1
                $region85: #{res_init_block_forward.3} parent=83 // loop_pre_header
                  _
                $region86: #{res_init_block_forward.3} parent=83 // loop_header
                  %s330 = sphi 0, %s334
                  %p331 = scmp.ge.s32.totalorder %s330, 1
                  %s335 = sphi %s295, %s295
                  %s336 = sphi %s289, %s289
                $region87: #{res_init_block_forward.3} parent=83 // loop_header_branch
                  %333 = sbr.rel (%p331) target = $region91
                $region88: #{res_init_block_forward.3} parent=83 // loop_body
                  _
                $region89: #{res_init_block_forward.3} parent=83 // loop_footer
                  %s334 = sadd.s32 1, %s330
                $region90: #{res_init_block_forward.3} parent=83 // loop_footer_branch
                  %329 = sbr.rel target = $region86
                $region91: #{res_init_block_forward.3} parent=83 // loop_exit
                  _
                loop: start=0, step=1, limit=1
                $region92: #{res_init_block_forward.3} parent=83 // loop_pre_header
                  _
                $region93: #{res_init_block_forward.3} parent=83 // loop_header
                  %s339 = sphi 0, %s343
                  %p340 = scmp.ge.s32.totalorder %s339, 1
                  %s344 = sphi %s295, %s295
                  %s345 = sphi %s289, %s289
                $region94: #{res_init_block_forward.3} parent=83 // loop_header_branch
                  %342 = sbr.rel (%p340) target = $region98
                $region95: #{res_init_block_forward.3} parent=83 // loop_body
                  %v346 = vld [vmem:[%s344] sm:$0x3]
                  %347 = vst [vmem:[%s345] sm:$0x3] %v346
                  %v348 = vld [vmem:[%s344 + $0x4] sm:$0x3]
                  %349 = vst [vmem:[%s345 + $0x2] sm:$0x3] %v348
                  %v350 = vld [vmem:[%s344 + $0x8] sm:$0x3]
                  %351 = vst [vmem:[%s345 + $0x4] sm:$0x3] %v350
                  %v352 = vld [vmem:[%s344 + $0xc] sm:$0x3]
                  %353 = vst [vmem:[%s345 + $0x6] sm:$0x3] %v352
                  %v354 = vld [vmem:[%s344 + $0x10] sm:$0x3]
                  %355 = vst [vmem:[%s345 + $0x8] sm:$0x3] %v354
                  %v356 = vld [vmem:[%s344 + $0x14] sm:$0x3]
                  %357 = vst [vmem:[%s345 + $0xa] sm:$0x3] %v356
                  %v358 = vld [vmem:[%s344 + $0x18] sm:$0x3]
                  %359 = vst [vmem:[%s345 + $0xc] sm:$0x3] %v358
                  %v360 = vld [vmem:[%s344 + $0x1c] sm:$0x3]
                  %361 = vst [vmem:[%s345 + $0xe] sm:$0x3] %v360
                $region96: #{res_init_block_forward.3} parent=83 // loop_footer
                  %s343 = sadd.s32 1, %s339
                $region97: #{res_init_block_forward.3} parent=83 // loop_footer_branch
                  %338 = sbr.rel target = $region93
                $region98: #{res_init_block_forward.3} parent=83 // loop_exit
                  _
              $region84: #{res_init_block_forward.3} parent=68 // pred_fallthru
                _
            $region69: #{res_init_block_forward.3} parent=64 // pred_fallthru
              _
            // Predicated region
            $region70: #{res_init_block_forward.3} parent=64 // pred_check
              _
            $region71: #{res_init_block_forward.3} parent=64 // pred_check_branch
              %301 = sbr.rel (0) target = $region73
            $region72: #{res_init_block_forward.3} parent=64 // pred_region
              loop: start=0, step=1, limit=1
              $region74: #{res_init_block_forward.3} parent=72 // loop_pre_header
                _
              $region75: #{res_init_block_forward.3} parent=72 // loop_header
                %s304 = sphi 0, %s308
                %p305 = scmp.ge.s32.totalorder %s304, 1
                %s309 = sphi %s295, %s295
                %s310 = sphi %s289, %s289
              $region76: #{res_init_block_forward.3} parent=72 // loop_header_branch
                %307 = sbr.rel (%p305) target = $region80
              $region77: #{res_init_block_forward.3} parent=72 // loop_body
                %v311 = vld [vmem:[%s309] sm:$0x3]
                %312 = vst [vmem:[%s310] sm:$0x3] %v311
                %v313 = vld [vmem:[%s309 + $0x4] sm:$0x3]
                %314 = vst [vmem:[%s310 + $0x2] sm:$0x3] %v313
                %v315 = vld [vmem:[%s309 + $0x8] sm:$0x3]
                %316 = vst [vmem:[%s310 + $0x4] sm:$0x3] %v315
                %v317 = vld [vmem:[%s309 + $0xc] sm:$0x3]
                %318 = vst [vmem:[%s310 + $0x6] sm:$0x3] %v317
                %v319 = vld [vmem:[%s309 + $0x10] sm:$0x3]
                %320 = vst [vmem:[%s310 + $0x8] sm:$0x3] %v319
                %v321 = vld [vmem:[%s309 + $0x14] sm:$0x3]
                %322 = vst [vmem:[%s310 + $0xa] sm:$0x3] %v321
                %v323 = vld [vmem:[%s309 + $0x18] sm:$0x3]
                %324 = vst [vmem:[%s310 + $0xc] sm:$0x3] %v323
                %v325 = vld [vmem:[%s309 + $0x1c] sm:$0x3]
                %326 = vst [vmem:[%s310 + $0xe] sm:$0x3] %v325
              $region78: #{res_init_block_forward.3} parent=72 // loop_footer
                %s308 = sadd.s32 1, %s304
              $region79: #{res_init_block_forward.3} parent=72 // loop_footer_branch
                %303 = sbr.rel target = $region75
              $region80: #{res_init_block_forward.3} parent=72 // loop_exit
                _
            $region73: #{res_init_block_forward.3} parent=64 // pred_fallthru
              _
          $region65: #{res_init_block_forward.3} parent=60 // pred_fallthru
            _
          %362 = vnop
        $region61: #{res_init_block_forward.3} parent=15 // pred_fallthru
          _
        // Predicated region
        $region99: #{res_init_block_forward.3} parent=15 // pred_check
          %p363 = pneg %p113
        $region100: #{res_init_block_forward.3} parent=15 // pred_check_branch
          %365 = sbr.rel (%p363) target = $region102
        $region101: #{res_init_block_forward.3} parent=15 // pred_region
          %s366 = smul.u32 %s20, 8
          %s367 = smul.u32 %s21, 8
          %s368 = sadd.s32 %s366, %s367
          %s369 = ssub.s32 %s368, 1
          %p370 = scmp.gt.s32.totalorder %s369, %s366
          %s371 = scalar_select %p370, %s369, %s366
          %p372 = scmp.lt.s32.totalorder %s371, 15
          %s373 = scalar_select %p372, %s371, 15
          %s374 = smul.addr %s373, 2
          %s375 = smul.addr %s374, 2
          %s376 = scalar_lea.vmem %s2, %s375
          %s377 = smul.u32 %s20, 8
          %s378 = smul.u32 %s21, 8
          %s379 = sadd.s32 %s377, %s378
          %s380 = ssub.s32 %s379, 1
          %p381 = scmp.gt.s32.totalorder %s380, %s377
          %s382 = scalar_select %p381, %s380, %s377
        $region102: #{res_init_block_forward.3} parent=15 // pred_fallthru
          _
        // Predicated region
        $region103: #{res_init_block_forward.3} parent=15 // pred_check
          %p383 = pneg %p151
        $region104: #{res_init_block_forward.3} parent=15 // pred_check_branch
          %385 = sbr.rel (%p383) target = $region106
        $region105: #{res_init_block_forward.3} parent=15 // pred_region
          %s386 = smul.u32 %s20, 8
          %s387 = smul.u32 %s21, 8
          %s388 = sadd.s32 %s386, %s387
          %s389 = ssub.s32 %s388, 1
          %p390 = scmp.gt.s32.totalorder %s389, %s386
          %s391 = scalar_select %p390, %s389, %s386
          %p392 = scmp.lt.s32.totalorder %s391, 15
          %s393 = scalar_select %p392, %s391, 15
          %s394 = smul.addr %s393, 2
          %s395 = sadd.s32 1, %s394
          %s396 = smul.addr %s395, 2
          %s397 = scalar_lea.vmem %s3, %s396
          %s398 = smul.u32 %s20, 8
          %s399 = smul.u32 %s21, 8
          %s400 = sadd.s32 %s398, %s399
          %s401 = ssub.s32 %s400, 1
          %p402 = scmp.gt.s32.totalorder %s401, %s398
          %s403 = scalar_select %p402, %s401, %s398
        $region106: #{res_init_block_forward.3} parent=15 // pred_fallthru
          _
      $region16: #{res_init_block_forward.3} parent=5 // pred_fallthru
        _
      %p404 = scmp.le.s32.totalorder 1, %s13
      %p405 = scmp.lt.s32.totalorder %s13, 3
      %p406 = pnand %p404, %p405
      %p407 = pneg %p406
      // Predicated region
      $region107: #{res_init_block_forward.3} parent=5 // pred_check
        _
      $region108: #{res_init_block_forward.3} parent=5 // pred_check_branch
        %409 = sbr.rel (%p406) target = $region110
      $region109: #{res_init_block_forward.3} parent=5 // pred_region
        %s410 = ssub.s32 %s13, 1
        %s411 = sand.u32 %s40, 1
        %s412 = sand.u32 %s40, 1
        %s413 = smul.addr %s412, 16
        %s414 = scalar_lea.vmem [#allocation2], %s413
        // Predicated region
        $region111: #{res_init_block_forward.3} parent=109 // pred_check
          %p415 = pneg %p53
        $region112: #{res_init_block_forward.3} parent=109 // pred_check_branch
          %417 = sbr.rel (%p415) target = $region114
        $region113: #{res_init_block_forward.3} parent=109 // pred_region
          _
        $region114: #{res_init_block_forward.3} parent=109 // pred_fallthru
          _
        %s418 = sand.u32 %s68, 1
        %s419 = sand.u32 %s68, 1
        %s420 = smul.addr %s419, 16
        %s421 = scalar_lea.vmem [#allocation3], %s420
        // Predicated region
        $region115: #{res_init_block_forward.3} parent=109 // pred_check
          %p422 = pneg %p81
        $region116: #{res_init_block_forward.3} parent=109 // pred_check_branch
          %424 = sbr.rel (%p422) target = $region118
        $region117: #{res_init_block_forward.3} parent=109 // pred_region
          _
        $region118: #{res_init_block_forward.3} parent=109 // pred_fallthru
          _
        %s425 = sand.u32 %s40, 1
        %s426 = sand.u32 %s40, 1
        %s427 = smul.addr %s426, 16
        %s428 = scalar_lea.vmem [#allocation2], %s427
        %p429 = pneg %p53
        %p430 = pneg %p50
        %s431 = sand.u32 %s68, 1
        %s432 = sand.u32 %s68, 1
        %s433 = smul.addr %s432, 16
        %s434 = scalar_lea.vmem [#allocation3], %s433
        %p435 = pneg %p81
        %p436 = pneg %p78
        %s437 = smul.u32 %s22, 8
        %s438 = smul.u32 %s23, 8
        %s439 = sadd.s32 %s437, %s438
        %s440 = ssub.s32 %s439, 1
        %p441 = scmp.gt.s32.totalorder %s440, %s437
        %s442 = scalar_select %p441, %s440, %s437
        %p443 = scmp.lt.s32.totalorder %s442, 15
        %s444 = scalar_select %p443, %s442, 15
        %s445 = smul.addr %s444, 2
        %s446 = smul.addr %s445, 2
        %s447 = scalar_lea.vmem %s2, %s446
        %p448 = pneg %p119
        %p449 = pneg %p116
        %s450 = smul.u32 %s22, 8
        %s451 = smul.u32 %s23, 8
        %s452 = sadd.s32 %s450, %s451
        %s453 = ssub.s32 %s452, 1
        %p454 = scmp.gt.s32.totalorder %s453, %s450
        %s455 = scalar_select %p454, %s453, %s450
        %p456 = scmp.lt.s32.totalorder %s455, 15
        %s457 = scalar_select %p456, %s455, 15
        %s458 = smul.addr %s457, 2
        %s459 = sadd.s32 1, %s458
        %s460 = smul.addr %s459, 2
        %s461 = scalar_lea.vmem %s3, %s460
        %p462 = pneg %p157
        %p463 = pneg %p154
        %p464 = pneg %p185
        %p465 = pneg %p182
        %s466 = sand.u32 %s172, 1
        %s467 = scalar_lea.sflag [#allocation5], %s466
        %s468 = sand.u32 %s172, 1
        %s469 = smul.addr %s468, 16
        %s470 = scalar_lea.vmem [#allocation4], %s469
        %s471 = sadd.s32 %s22, %s23
        %s472 = smul.u32 8, %s471
        %s473 = sadd.s32 %s22, %s23
        %s474 = smul.u32 8, %s473
        %s475 = smul.u32 %s22, 8
        %s476 = smul.u32 %s23, 8
        %s477 = sadd.s32 %s475, %s476
        %s478 = ssub.s32 %s477, 1
        %p479 = scmp.gt.s32.totalorder %s478, %s475
        %s480 = scalar_select %p479, %s478, %s475
        %p481 = scmp.lt.s32.totalorder %s480, 15
        %s482 = scalar_select %p481, %s480, 15
        %s483 = smul.addr %s482, 2
        %s484 = smul.addr %s483, 2
        %s485 = scalar_lea.vmem %s2, %s484
        %s486 = smul.u32 %s22, 8
        %s487 = smul.u32 %s23, 8
        %s488 = sadd.s32 %s486, %s487
        %s489 = ssub.s32 %s488, 1
        %p490 = scmp.gt.s32.totalorder %s489, %s486
        %s491 = scalar_select %p490, %s489, %s486
        %s492 = smul.u32 %s22, 8
        %s493 = smul.u32 %s23, 8
        %s494 = sadd.s32 %s492, %s493
        %s495 = ssub.s32 %s494, 1
        %p496 = scmp.gt.s32.totalorder %s495, %s492
        %s497 = scalar_select %p496, %s495, %s492
        %p498 = scmp.lt.s32.totalorder %s497, 15
        %s499 = scalar_select %p498, %s497, 15
        %s500 = smul.addr %s499, 2
        %s501 = sadd.s32 1, %s500
        %s502 = smul.addr %s501, 2
        %s503 = scalar_lea.vmem %s3, %s502
        %s504 = smul.u32 %s22, 8
        %s505 = smul.u32 %s23, 8
        %s506 = sadd.s32 %s504, %s505
        %s507 = ssub.s32 %s506, 1
        %p508 = scmp.gt.s32.totalorder %s507, %s504
        %s509 = scalar_select %p508, %s507, %s504
        %s510 = smul.u32 4, %s23
        %v511 = vld [vmem:[%s414] sm:$0x3]
        %v512 = vld [vmem:[%s414 + $0x2] sm:$0x3]
        %v513 = vld [vmem:[%s414 + $0x4] sm:$0x3]
        %v514 = vld [vmem:[%s414 + $0x6] sm:$0x3]
        %v515 = vld [vmem:[%s414 + $0x8] sm:$0x3]
        %v516 = vld [vmem:[%s414 + $0xa] sm:$0x3]
        %v517 = vld [vmem:[%s414 + $0xc] sm:$0x3]
        %v518 = vld [vmem:[%s414 + $0xe] sm:$0x3]
        %v519 = vunpack.c.l.bf16 %v511
        %v520 = vunpack.c.l.bf16 %v512
        %v521 = vunpack.c.l.bf16 %v513
        %v522 = vunpack.c.l.bf16 %v514
        %v523 = vunpack.c.l.bf16 %v515
        %v524 = vunpack.c.l.bf16 %v516
        %v525 = vunpack.c.l.bf16 %v517
        %v526 = vunpack.c.l.bf16 %v518
        %v527 = vld [vmem:[%s421] sm:$0x3]
        %v528 = vld [vmem:[%s421 + $0x2] sm:$0x3]
        %v529 = vld [vmem:[%s421 + $0x4] sm:$0x3]
        %v530 = vld [vmem:[%s421 + $0x6] sm:$0x3]
        %v531 = vld [vmem:[%s421 + $0x8] sm:$0x3]
        %v532 = vld [vmem:[%s421 + $0xa] sm:$0x3]
        %v533 = vld [vmem:[%s421 + $0xc] sm:$0x3]
        %v534 = vld [vmem:[%s421 + $0xe] sm:$0x3]
        %v535 = vunpack.c.l.bf16 %v527
        %v536 = vunpack.c.l.bf16 %v528
        %v537 = vunpack.c.l.bf16 %v529
        %v538 = vunpack.c.l.bf16 %v530
        %v539 = vunpack.c.l.bf16 %v531
        %v540 = vunpack.c.l.bf16 %v532
        %v541 = vunpack.c.l.bf16 %v533
        %v542 = vunpack.c.l.bf16 %v534
        %v543 = vld [vmem:[%s485] sm:$0x3]
        %v544 = vunpack.c.l.bf16 %v543
        %v545 = vld [vmem:[%s503] sm:$0x3]
        %v546 = vunpack.c.l.bf16 %v545
        %v555 = vrot.slane %v535, 7
        %v556 = vrot.slane %v536, 7
        %v557 = vrot.slane %v537, 7
        %v558 = vrot.slane %v538, 7
        %v559 = vrot.slane %v539, 7
        %v560 = vrot.slane %v540, 7
        %v561 = vrot.slane %v541, 7
        %v562 = vrot.slane %v542, 7
        %vm571 = vcmask 1040384
        %v572 = vsel %vm571, %v535, %v555
        %v573 = vsel %vm571, %v536, %v556
        %v574 = vsel %vm571, %v537, %v557
        %v575 = vsel %vm571, %v538, %v558
        %v576 = vsel %vm571, %v539, %v559
        %v577 = vsel %vm571, %v540, %v560
        %v578 = vsel %vm571, %v541, %v561
        %v579 = vsel %vm571, %v542, %v562
        %v581 = vrot.slane %v546, 7
        %v583 = vsel %vm571, %v546, %v581
        %v584 = vmax.f32 %v519, %v535
        %v585 = vmax.f32 %v520, %v536
        %v586 = vmax.f32 %v521, %v537
        %v587 = vmax.f32 %v522, %v538
        %v588 = vmax.f32 %v523, %v539
        %v589 = vmax.f32 %v524, %v540
        %v590 = vmax.f32 %v525, %v541
        %v591 = vmax.f32 %v526, %v542
        %v592 = vmax.f32 %v584, %v572
        %v593 = vmax.f32 %v585, %v573
        %v594 = vmax.f32 %v586, %v574
        %v595 = vmax.f32 %v587, %v575
        %v596 = vmax.f32 %v588, %v576
        %v597 = vmax.f32 %v589, %v577
        %v598 = vmax.f32 %v590, %v578
        %v599 = vmax.f32 %v591, %v579
        %v600 = vmax.f32 %v544, %v546
        %v601 = vmax.f32 %v600, %v583
        %v602 = vmax.f32 %v601, %v592
        %v603 = vmax.f32 %v602, %v593
        %vm604 = vcmask 257024
        %605 = vst.msk [vmem:[%s470] sm:$0xf] %vm604, %v603
        %v606 = vmax.f32 %v593, %v594
        %v607 = vmax.f32 %v606, %v595
        %s608 = scalar_lea.vmem %s470, 4 [#allocation4]
        %609 = vst.msk [vmem:[%s608] sm:$0xf] %vm604, %v607
        %v610 = vmax.f32 %v595, %v596
        %v611 = vmax.f32 %v610, %v597
        %s612 = scalar_lea.vmem %s470, 8 [#allocation4]
        %613 = vst.msk [vmem:[%s612] sm:$0xf] %vm604, %v611
        %v614 = vmax.f32 %v597, %v598
        %v615 = vmax.f32 %v614, %v599
        %s616 = scalar_lea.vmem %s470, 12 [#allocation4]
        %617 = vst.msk [vmem:[%s616] sm:$0xf] %vm604, %v615
        %s618 = sand.u32 %s172, 1
        %s619 = scalar_lea.sflag [#allocation5], %s618
        %s620 = sand.u32 %s172, 1
        %s621 = smul.addr %s620, 16
        %s622 = scalar_lea.vmem [#allocation4], %s621
        // Predicated region
        $region119: #{res_init_block_forward.3} parent=109 // pred_check
          %p623 = pneg %p182
        $region120: #{res_init_block_forward.3} parent=109 // pred_check_branch
          %625 = sbr.rel (%p623) target = $region122
        $region121: #{res_init_block_forward.3} parent=109 // pred_region
          %s626 = smul.u32 4, %s23
          %s628 = ssub.s32 256, 256
          %629 = vsyncadd %s619, %s628
          %s630 = smul.addr %s22, 4
          %s631 = sadd.s32 %s626, %s630
          %s632 = smul.addr %s631, 64
          %s633 = scalar_lea.hbm %s4, %s632
          %s634 = sshll.u32 %s622, 4
          %s635 = int_to_ptr.vmem [resolvable:$true] %s634
          %640 = dma.vmem_to_hbm [thread:$0]  %s635, 256, %s633, %s619, 64, 64, 4
        $region122: #{res_init_block_forward.3} parent=109 // pred_fallthru
          _
      $region110: #{res_init_block_forward.3} parent=5 // pred_fallthru
        _
      %p641 = scmp.le.s32.totalorder 2, %s13
      // Predicated region
      $region123: #{res_init_block_forward.3} parent=5 // pred_check
        %p642 = pneg %p641
      $region124: #{res_init_block_forward.3} parent=5 // pred_check_branch
        %644 = sbr.rel (%p642) target = $region126
      $region125: #{res_init_block_forward.3} parent=5 // pred_region
        %s645 = ssub.s32 %s13, 2
        // Predicated region
        $region127: #{res_init_block_forward.3} parent=125 // pred_check
          %p646 = pneg %p188
        $region128: #{res_init_block_forward.3} parent=125 // pred_check_branch
          %648 = sbr.rel (%p646) target = $region130
        $region129: #{res_init_block_forward.3} parent=125 // pred_region
          %s649 = sand.u32 %s173, 1
          %s650 = scalar_lea.sflag [#allocation5], %s649
          %s651 = sand.u32 %s173, 1
          %s652 = smul.addr %s651, 16
          %s653 = scalar_lea.vmem [#allocation4], %s652
          %654 = dma.done %s650, 256
        $region130: #{res_init_block_forward.3} parent=125 // pred_fallthru
          _
      $region126: #{res_init_block_forward.3} parent=5 // pred_fallthru
        _
    $region6: #{res_init_block_forward.3} parent=1 // loop_footer
      %s17 = sadd.s32 1, %s13
    $region7: #{res_init_block_forward.3} parent=1 // loop_footer_branch
      %12 = sbr.rel target = $region3
    $region8: #{res_init_block_forward.3} parent=1 // loop_exit
      _
    %655 = vsyncpa [#allocation5], 1
    %s656 = scalar_lea.sflag [#allocation5], 1
    %657 = vsyncpa %s656, 1

// kernel: res_init_block_forward.2
$region0: #{res_init_block_forward.2}
  #allocation0 [shape = 'u32[]', space=smem, size = 0x4, offset = 0x4, fixed_abs, tag = 'smem constant byte address 0x4 - core index']
  #allocation1 [shape = 'u32[144,128]{1,0:T(1,128)}', space=vmem, size = 0x12000, scoped, tag = 'internal scratch']
  %s0 = inlined_call_operand.vmem [shape: bf16[32,896], index: 0, kind: input, shape index: {}]
  %s1 = inlined_call_operand.vmem [shape: bf16[896,128], index: 1, kind: input, shape index: {}]
  %s2 = inlined_call_operand.vmem [shape: f32[1,128], index: 2, kind: input, shape index: {}]
  %s3 = inlined_call_operand.vmem [shape: bf16[32,128], index: 3, kind: output, shape index: {}]
  %s4 = sld [smem:[#allocation0]]
  $region45: #{res_init_block_forward.2} parent=0
    _
  %s6 = ssub.s32 1, %s4
  %s7 = scalar_select 0, %s6, %s4
  loop: start=0, step=1, limit=6
  $region2: #{res_init_block_forward.2} parent=0 // loop_pre_header
    _
  $region3: #{res_init_block_forward.2} parent=0 // loop_header
    %s9 = sphi 0, %s13
    %p10 = scmp.ge.s32.totalorder %s9, 6
    %s19 = sphi 0, %s21
    %s22 = sphi 0, %s19
    %s23 = sphi 0, %s22
    %s39 = sphi 0, %s23
    %s43 = sphi 0, %s43
    %s45 = sphi 0, %s43
    %s46 = sphi 0, %s45
    %s60 = sphi 0, %s46
    %s64 = sphi 0, %s64
    %s66 = sphi 0, %s64
    %s67 = sphi 0, %s66
    %s81 = sphi 0, %s67
    %s87 = sphi 0, %s89
    %s90 = sphi 0, %s87
    %s91 = sphi 0, %s90
    %s107 = sphi 0, %s91
  $region4: #{res_init_block_forward.2} parent=0 // loop_header_branch
    %12 = sbr.rel (%p10) target = $region8
  $region5: #{res_init_block_forward.2} parent=0 // loop_body
    %s14 = ssub.s32 %s9, 1
    %s15 = ssub.s32 %s9, 2
    %s16 = sadd.s32 %s9, 1
    %s17 = ssub.s32 %s9, %s16
    %p18 = scmp.eq.s32.totalorder %s17, 0
    %s20 = sadd.s32 %s19, 1
    %s21 = scalar_select %p18, %s19, %s20
    %p24 = pneg %p18
    %p25 = scmp.eq.s32.totalorder %s9, 3
    %p26 = por %p24, %p25
    %p27 = scmp.ne.s32.totalorder %s19, %s22
    %p28 = scmp.eq.s32.totalorder %s9, 0
    %p29 = por %p27, %p28
    %p30 = scmp.ne.s32.totalorder %s19, %s22
    %p31 = scmp.eq.s32.totalorder %s14, 3
    %p32 = por %p30, %p31
    %p33 = scmp.ne.s32.totalorder %s22, %s23
    %p34 = scmp.eq.s32.totalorder %s14, 0
    %p35 = por %p33, %p34
    %p36 = scmp.ne.s32.totalorder %s22, %s23
    %p37 = scmp.eq.s32.totalorder %s15, 3
    %p38 = por %p36, %p37
    %p40 = scmp.ne.s32.totalorder %s23, %s39
    %p41 = scmp.eq.s32.totalorder %s15, 0
    %p42 = por %p40, %p41
    %s44 = sadd.s32 %s43, 1
    %p47 = scmp.eq.s32.totalorder %s9, 3
    %p48 = scmp.ne.s32.totalorder %s43, %s45
    %p49 = scmp.eq.s32.totalorder %s9, 0
    %p50 = por %p48, %p49
    %p51 = scmp.ne.s32.totalorder %s43, %s45
    %p52 = scmp.eq.s32.totalorder %s14, 3
    %p53 = por %p51, %p52
    %p54 = scmp.ne.s32.totalorder %s45, %s46
    %p55 = scmp.eq.s32.totalorder %s14, 0
    %p56 = por %p54, %p55
    %p57 = scmp.ne.s32.totalorder %s45, %s46
    %p58 = scmp.eq.s32.totalorder %s15, 3
    %p59 = por %p57, %p58
    %p61 = scmp.ne.s32.totalorder %s46, %s60
    %p62 = scmp.eq.s32.totalorder %s15, 0
    %p63 = por %p61, %p62
    %s65 = sadd.s32 %s64, 1
    %p68 = scmp.eq.s32.totalorder %s9, 3
    %p69 = scmp.ne.s32.totalorder %s64, %s66
    %p70 = scmp.eq.s32.totalorder %s9, 0
    %p71 = por %p69, %p70
    %p72 = scmp.ne.s32.totalorder %s64, %s66
    %p73 = scmp.eq.s32.totalorder %s14, 3
    %p74 = por %p72, %p73
    %p75 = scmp.ne.s32.totalorder %s66, %s67
    %p76 = scmp.eq.s32.totalorder %s14, 0
    %p77 = por %p75, %p76
    %p78 = scmp.ne.s32.totalorder %s66, %s67
    %p79 = scmp.eq.s32.totalorder %s15, 3
    %p80 = por %p78, %p79
    %p82 = scmp.ne.s32.totalorder %s67, %s81
    %p83 = scmp.eq.s32.totalorder %s15, 0
    %p84 = por %p82, %p83
    %s85 = ssub.s32 %s9, %s16
    %p86 = scmp.eq.s32.totalorder %s85, 0
    %s88 = sadd.s32 %s87, 1
    %s89 = scalar_select %p86, %s87, %s88
    %p92 = pneg %p86
    %p93 = scmp.eq.s32.totalorder %s9, 3
    %p94 = por %p92, %p93
    %p95 = scmp.ne.s32.totalorder %s87, %s90
    %p96 = scmp.eq.s32.totalorder %s9, 0
    %p97 = por %p95, %p96
    %p98 = scmp.ne.s32.totalorder %s87, %s90
    %p99 = scmp.eq.s32.totalorder %s14, 3
    %p100 = por %p98, %p99
    %p101 = scmp.ne.s32.totalorder %s90, %s91
    %p102 = scmp.eq.s32.totalorder %s14, 0
    %p103 = por %p101, %p102
    %p104 = scmp.ne.s32.totalorder %s90, %s91
    %p105 = scmp.eq.s32.totalorder %s15, 3
    %p106 = por %p104, %p105
    %p108 = scmp.ne.s32.totalorder %s91, %s107
    %p109 = scmp.eq.s32.totalorder %s15, 0
    %p110 = por %p108, %p109
    %p111 = scmp.le.s32.totalorder 1, %s9
    %p112 = scmp.lt.s32.totalorder %s9, 5
    %p113 = pnand %p111, %p112
    %p114 = pneg %p113
    // Predicated region
    $region9: #{res_init_block_forward.2} parent=5 // pred_check
      _
    $region10: #{res_init_block_forward.2} parent=5 // pred_check_branch
      %116 = sbr.rel (%p113) target = $region12
    $region11: #{res_init_block_forward.2} parent=5 // pred_region
      %s117 = ssub.s32 %s9, 1
      // Predicated region
      $region13: #{res_init_block_forward.2} parent=11 // pred_check
        %p118 = pneg %p56
      $region14: #{res_init_block_forward.2} parent=11 // pred_check_branch
        %120 = sbr.rel (%p118) target = $region16
      $region15: #{res_init_block_forward.2} parent=11 // pred_region
        _
      $region16: #{res_init_block_forward.2} parent=11 // pred_fallthru
        _
      // Predicated region
      $region17: #{res_init_block_forward.2} parent=11 // pred_check
        %p121 = pneg %p77
      $region18: #{res_init_block_forward.2} parent=11 // pred_check_branch
        %123 = sbr.rel (%p121) target = $region20
      $region19: #{res_init_block_forward.2} parent=11 // pred_region
        _
      $region20: #{res_init_block_forward.2} parent=11 // pred_fallthru
        _
    $region12: #{res_init_block_forward.2} parent=5 // pred_fallthru
      _
    %p124 = scmp.lt.s32.totalorder %s9, 4
    // Predicated region
    $region21: #{res_init_block_forward.2} parent=5 // pred_check
      %p125 = pneg %p124
    $region22: #{res_init_block_forward.2} parent=5 // pred_check_branch
      %127 = sbr.rel (%p125) target = $region24
    $region23: #{res_init_block_forward.2} parent=5 // pred_region
      // Predicated region
      $region25: #{res_init_block_forward.2} parent=23 // pred_check
        %p128 = pneg %p29
      $region26: #{res_init_block_forward.2} parent=23 // pred_check_branch
        %130 = sbr.rel (%p128) target = $region28
      $region27: #{res_init_block_forward.2} parent=23 // pred_region
        %p131 = scmp.lt.s32.totalorder %s9, 3
        %s132 = scalar_select %p131, %s9, 3
        %s133 = smul.addr %s132, 7
        %s134 = smul.addr %s133, 4
        %s135 = scalar_lea.vmem %s0, %s134
      $region28: #{res_init_block_forward.2} parent=23 // pred_fallthru
        _
    $region24: #{res_init_block_forward.2} parent=5 // pred_fallthru
      _
    %p136 = scmp.le.s32.totalorder 1, %s9
    %p137 = scmp.lt.s32.totalorder %s9, 5
    %p138 = pnand %p136, %p137
    %p139 = pneg %p138
    // Predicated region
    $region29: #{res_init_block_forward.2} parent=5 // pred_check
      _
    $region30: #{res_init_block_forward.2} parent=5 // pred_check_branch
      %141 = sbr.rel (%p138) target = $region32
    $region31: #{res_init_block_forward.2} parent=5 // pred_region
      %s142 = ssub.s32 %s9, 1
      %p143 = scmp.lt.s32.totalorder %s14, 3
      %s144 = scalar_select %p143, %s14, 3
      %s145 = smul.addr %s144, 7
      %s146 = smul.addr %s145, 4
      %s147 = scalar_lea.vmem %s0, %s146
      %p148 = pneg %p35
      %p149 = pneg %p32
      %p150 = pneg %p56
      %p151 = pneg %p53
      %p152 = pneg %p77
      %p153 = pneg %p74
      %p154 = pneg %p103
      %p155 = pneg %p100
      %p156 = scmp.lt.s32.totalorder %s14, 3
      %s157 = scalar_select %p156, %s14, 3
      %s158 = smul.addr %s157, 4
      %s159 = scalar_lea.vmem %s3, %s158
      %p160 = scmp.lt.s32.totalorder %s14, 3
      %s161 = scalar_select %p160, %s14, 3
      %s162 = smul.addr %s161, 7
      %s163 = smul.addr %s162, 4
      %s164 = scalar_lea.vmem %s0, %s163
      %p165 = scmp.lt.s32.totalorder %s14, 3
      %s166 = scalar_select %p165, %s14, 3
      %s167 = smul.addr %s166, 4
      %s168 = scalar_lea.vmem %s3, %s167
      %v170 = vld [vmem:[%s164] sm:$0xff]
      %v171 = vld [vmem:[%s164 + $0x8] sm:$0xff]
      %v172 = vld [vmem:[%s164 + $0x10] sm:$0xff]
      %v173 = vld [vmem:[%s164 + $0x18] sm:$0xf]
      %v174 = vld [vmem:[%s1] sm:$0xf]
      %v175 = vld [vmem:[%s1 + $0x4] sm:$0xf]
      %v176 = vld [vmem:[%s1 + $0x8] sm:$0xf]
      %v177 = vld [vmem:[%s1 + $0xc] sm:$0xf]
      %v178 = vld [vmem:[%s1 + $0x10] sm:$0xf]
      %v179 = vld [vmem:[%s1 + $0x14] sm:$0xf]
      %v180 = vld [vmem:[%s1 + $0x18] sm:$0xf]
      %v181 = vld [vmem:[%s1 + $0x1c] sm:$0xf]
      %v182 = vld [vmem:[%s1 + $0x20] sm:$0xf]
      %v183 = vld [vmem:[%s1 + $0x24] sm:$0xf]
      %v184 = vld [vmem:[%s1 + $0x28] sm:$0xf]
      %v185 = vld [vmem:[%s1 + $0x2c] sm:$0xf]
      %v186 = vld [vmem:[%s1 + $0x30] sm:$0xf]
      %v187 = vld [vmem:[%s1 + $0x34] sm:$0xf]
      %v188 = vld [vmem:[%s1 + $0x38] sm:$0xf]
      %v189 = vld [vmem:[%s1 + $0x3c] sm:$0xf]
      %v190 = vld [vmem:[%s1 + $0x40] sm:$0xf]
      %v191 = vld [vmem:[%s1 + $0x44] sm:$0xf]
      %v192 = vld [vmem:[%s1 + $0x48] sm:$0xf]
      %v193 = vld [vmem:[%s1 + $0x4c] sm:$0xf]
      %v194 = vld [vmem:[%s1 + $0x50] sm:$0xf]
      %v195 = vld [vmem:[%s1 + $0x54] sm:$0xf]
      %v196 = vld [vmem:[%s1 + $0x58] sm:$0xf]
      %v197 = vld [vmem:[%s1 + $0x5c] sm:$0xf]
      %v198 = vld [vmem:[%s1 + $0x60] sm:$0xf]
      %v199 = vld [vmem:[%s1 + $0x64] sm:$0xf]
      %v200 = vld [vmem:[%s1 + $0x68] sm:$0xf]
      %v201 = vld [vmem:[%s1 + $0x6c] sm:$0xf]
      %v202 = vld [vmem:[%s1 + $0x70] sm:$0xf]
      %v203 = vld [vmem:[%s1 + $0x74] sm:$0xf]
      %v204 = vld [vmem:[%s1 + $0x78] sm:$0xf]
      %v205 = vld [vmem:[%s1 + $0x7c] sm:$0xf]
      %v206 = vld [vmem:[%s1 + $0x80] sm:$0xf]
      %v207 = vld [vmem:[%s1 + $0x84] sm:$0xf]
      %v208 = vld [vmem:[%s1 + $0x88] sm:$0xf]
      %v209 = vld [vmem:[%s1 + $0x8c] sm:$0xf]
      %v210 = vld [vmem:[%s1 + $0x90] sm:$0xf]
      %v211 = vld [vmem:[%s1 + $0x94] sm:$0xf]
      %v212 = vld [vmem:[%s1 + $0x98] sm:$0xf]
      %v213 = vld [vmem:[%s1 + $0x9c] sm:$0xf]
      %v214 = vld [vmem:[%s1 + $0xa0] sm:$0xf]
      %v215 = vld [vmem:[%s1 + $0xa4] sm:$0xf]
      %v216 = vld [vmem:[%s1 + $0xa8] sm:$0xf]
      %v217 = vld [vmem:[%s1 + $0xac] sm:$0xf]
      %v218 = vld [vmem:[%s1 + $0xb0] sm:$0xf]
      %v219 = vld [vmem:[%s1 + $0xb4] sm:$0xf]
      %v220 = vld [vmem:[%s1 + $0xb8] sm:$0xf]
      %v221 = vld [vmem:[%s1 + $0xbc] sm:$0xf]
      %v222 = vld [vmem:[%s1 + $0xc0] sm:$0xf]
      %v223 = vld [vmem:[%s1 + $0xc4] sm:$0xf]
      %v224 = vld [vmem:[%s1 + $0xc8] sm:$0xf]
      %v225 = vld [vmem:[%s1 + $0xcc] sm:$0xf]
      %v226 = vld [vmem:[%s1 + $0xd0] sm:$0xf]
      %v227 = vld [vmem:[%s1 + $0xd4] sm:$0xf]
      %v228 = vld [vmem:[%s1 + $0xd8] sm:$0xf]
      %v229 = vld [vmem:[%s1 + $0xdc] sm:$0xf]
      %v230 = vld [vmem:[%s1 + $0xe0] sm:$0xf]
      %v231 = vld [vmem:[%s1 + $0xe4] sm:$0xf]
      %v232 = vld [vmem:[%s1 + $0xe8] sm:$0xf]
      %v233 = vld [vmem:[%s1 + $0xec] sm:$0xf]
      %v234 = vld [vmem:[%s1 + $0xf0] sm:$0xf]
      %v235 = vld [vmem:[%s1 + $0xf4] sm:$0xf]
      %v236 = vld [vmem:[%s1 + $0xf8] sm:$0xf]
      %v237 = vld [vmem:[%s1 + $0xfc] sm:$0xf]
      %v238 = vld [vmem:[%s1 + $0x100] sm:$0xf]
      %v239 = vld [vmem:[%s1 + $0x104] sm:$0xf]
      %v240 = vld [vmem:[%s1 + $0x108] sm:$0xf]
      %v241 = vld [vmem:[%s1 + $0x10c] sm:$0xf]
      %v242 = vld [vmem:[%s1 + $0x110] sm:$0xf]
      %v243 = vld [vmem:[%s1 + $0x114] sm:$0xf]
      %v244 = vld [vmem:[%s1 + $0x118] sm:$0xf]
      %v245 = vld [vmem:[%s1 + $0x11c] sm:$0xf]
      %v246 = vld [vmem:[%s1 + $0x120] sm:$0xf]
      %v247 = vld [vmem:[%s1 + $0x124] sm:$0xf]
      %v248 = vld [vmem:[%s1 + $0x128] sm:$0xf]
      %v249 = vld [vmem:[%s1 + $0x12c] sm:$0xf]
      %v250 = vld [vmem:[%s1 + $0x130] sm:$0xf]
      %v251 = vld [vmem:[%s1 + $0x134] sm:$0xf]
      %v252 = vld [vmem:[%s1 + $0x138] sm:$0xf]
      %v253 = vld [vmem:[%s1 + $0x13c] sm:$0xf]
      %v254 = vld [vmem:[%s1 + $0x140] sm:$0xf]
      %v255 = vld [vmem:[%s1 + $0x144] sm:$0xf]
      %v256 = vld [vmem:[%s1 + $0x148] sm:$0xf]
      %v257 = vld [vmem:[%s1 + $0x14c] sm:$0xf]
      %v258 = vld [vmem:[%s1 + $0x150] sm:$0xf]
      %v259 = vld [vmem:[%s1 + $0x154] sm:$0xf]
      %v260 = vld [vmem:[%s1 + $0x158] sm:$0xf]
      %v261 = vld [vmem:[%s1 + $0x15c] sm:$0xf]
      %v262 = vld [vmem:[%s1 + $0x160] sm:$0xf]
      %v263 = vld [vmem:[%s1 + $0x164] sm:$0xf]
      %v264 = vld [vmem:[%s1 + $0x168] sm:$0xf]
      %v265 = vld [vmem:[%s1 + $0x16c] sm:$0xf]
      %v266 = vld [vmem:[%s1 + $0x170] sm:$0xf]
      %v267 = vld [vmem:[%s1 + $0x174] sm:$0xf]
      %v268 = vld [vmem:[%s1 + $0x178] sm:$0xf]
      %v269 = vld [vmem:[%s1 + $0x17c] sm:$0xf]
      %v270 = vld [vmem:[%s1 + $0x180] sm:$0xf]
      %v271 = vld [vmem:[%s1 + $0x184] sm:$0xf]
      %v272 = vld [vmem:[%s1 + $0x188] sm:$0xf]
      %v273 = vld [vmem:[%s1 + $0x18c] sm:$0xf]
      %v274 = vld [vmem:[%s1 + $0x190] sm:$0xf]
      %v275 = vld [vmem:[%s1 + $0x194] sm:$0xf]
      %v276 = vld [vmem:[%s1 + $0x198] sm:$0xf]
      %v277 = vld [vmem:[%s1 + $0x19c] sm:$0xf]
      %v278 = vld [vmem:[%s1 + $0x1a0] sm:$0xf]
      %v279 = vld [vmem:[%s1 + $0x1a4] sm:$0xf]
      %v280 = vld [vmem:[%s1 + $0x1a8] sm:$0xf]
      %v281 = vld [vmem:[%s1 + $0x1ac] sm:$0xf]
      %v282 = vld [vmem:[%s1 + $0x1b0] sm:$0xf]
      %v283 = vld [vmem:[%s1 + $0x1b4] sm:$0xf]
      %v284 = vld [vmem:[%s1 + $0x1b8] sm:$0xf]
      %v285 = vld [vmem:[%s1 + $0x1bc] sm:$0xf]
      %v286 = vld [vmem:[%s2] sm:$0x1]
      %v288 = vlaneseq
      %v289 = vshrl.u32 %v288, 7
      %v290 = vsub.s32 0, %v289
      %v291 = vrot.slane %v286, %v290
      %v297 = vunpack.c.l.b16 %v170
      %v298 = vunpack.c.h.b16 %v170
      %v299 = vunpack.c.l.b16 %v171
      %v300 = vunpack.c.h.b16 %v171
      %v301 = vunpack.c.l.b16 %v172
      %v302 = vunpack.c.h.b16 %v172
      %v303 = vunpack.c.l.b16 %v173
      %v304 = vpack.c.b16 %v297, %v297
      %v305 = vpack.c.b16 %v298, %v298
      %v306 = vpack.c.b16 %v299, %v299
      %v307 = vpack.c.b16 %v300, %v300
      %v308 = vpack.c.b16 %v301, %v301
      %v309 = vpack.c.b16 %v302, %v302
      %v310 = vpack.c.b16 %v303, %v303
      %v430 = vunpack.c.l.b16 %v174
      %v431 = vunpack.c.l.b16 %v175
      %v432 = vunpack.c.l.b16 %v176
      %v433 = vunpack.c.l.b16 %v177
      %v434 = vunpack.c.l.b16 %v178
      %v435 = vunpack.c.l.b16 %v179
      %v436 = vunpack.c.l.b16 %v180
      %v437 = vunpack.c.l.b16 %v181
      %v438 = vunpack.c.l.b16 %v182
      %v439 = vunpack.c.l.b16 %v183
      %v440 = vunpack.c.l.b16 %v184
      %v441 = vunpack.c.l.b16 %v185
      %v442 = vunpack.c.l.b16 %v186
      %v443 = vunpack.c.l.b16 %v187
      %v444 = vunpack.c.l.b16 %v188
      %v445 = vunpack.c.l.b16 %v189
      %v446 = vunpack.c.l.b16 %v190
      %v447 = vunpack.c.l.b16 %v191
      %v448 = vunpack.c.l.b16 %v192
      %v449 = vunpack.c.l.b16 %v193
      %v450 = vunpack.c.l.b16 %v194
      %v451 = vunpack.c.l.b16 %v195
      %v452 = vunpack.c.l.b16 %v196
      %v453 = vunpack.c.l.b16 %v197
      %v454 = vunpack.c.l.b16 %v198
      %v455 = vunpack.c.l.b16 %v199
      %v456 = vunpack.c.l.b16 %v200
      %v457 = vunpack.c.l.b16 %v201
      %v458 = vunpack.c.l.b16 %v202
      %v459 = vunpack.c.l.b16 %v203
      %v460 = vunpack.c.l.b16 %v204
      %v461 = vunpack.c.l.b16 %v205
      %v462 = vunpack.c.l.b16 %v206
      %v463 = vunpack.c.l.b16 %v207
      %v464 = vunpack.c.l.b16 %v208
      %v465 = vunpack.c.l.b16 %v209
      %v466 = vunpack.c.l.b16 %v210
      %v467 = vunpack.c.l.b16 %v211
      %v468 = vunpack.c.l.b16 %v212
      %v469 = vunpack.c.l.b16 %v213
      %v470 = vunpack.c.l.b16 %v214
      %v471 = vunpack.c.l.b16 %v215
      %v472 = vunpack.c.l.b16 %v216
      %v473 = vunpack.c.l.b16 %v217
      %v474 = vunpack.c.l.b16 %v218
      %v475 = vunpack.c.l.b16 %v219
      %v476 = vunpack.c.l.b16 %v220
      %v477 = vunpack.c.l.b16 %v221
      %v478 = vunpack.c.l.b16 %v222
      %v479 = vunpack.c.l.b16 %v223
      %v480 = vunpack.c.l.b16 %v224
      %v481 = vunpack.c.l.b16 %v225
      %v482 = vunpack.c.l.b16 %v226
      %v483 = vunpack.c.l.b16 %v227
      %v484 = vunpack.c.l.b16 %v228
      %v485 = vunpack.c.l.b16 %v229
      %v486 = vunpack.c.l.b16 %v230
      %v487 = vunpack.c.l.b16 %v231
      %v488 = vunpack.c.l.b16 %v232
      %v489 = vunpack.c.l.b16 %v233
      %v490 = vunpack.c.l.b16 %v234
      %v491 = vunpack.c.l.b16 %v235
      %v492 = vunpack.c.l.b16 %v236
      %v493 = vunpack.c.l.b16 %v237
      %v494 = vunpack.c.l.b16 %v238
      %v495 = vunpack.c.l.b16 %v239
      %v496 = vunpack.c.l.b16 %v240
      %v497 = vunpack.c.l.b16 %v241
      %v498 = vunpack.c.l.b16 %v242
      %v499 = vunpack.c.l.b16 %v243
      %v500 = vunpack.c.l.b16 %v244
      %v501 = vunpack.c.l.b16 %v245
      %v502 = vunpack.c.l.b16 %v246
      %v503 = vunpack.c.l.b16 %v247
      %v504 = vunpack.c.l.b16 %v248
      %v505 = vunpack.c.l.b16 %v249
      %v506 = vunpack.c.l.b16 %v250
      %v507 = vunpack.c.l.b16 %v251
      %v508 = vunpack.c.l.b16 %v252
      %v509 = vunpack.c.l.b16 %v253
      %v510 = vunpack.c.l.b16 %v254
      %v511 = vunpack.c.l.b16 %v255
      %v512 = vunpack.c.l.b16 %v256
      %v513 = vunpack.c.l.b16 %v257
      %v514 = vunpack.c.l.b16 %v258
      %v515 = vunpack.c.l.b16 %v259
      %v516 = vunpack.c.l.b16 %v260
      %v517 = vunpack.c.l.b16 %v261
      %v518 = vunpack.c.l.b16 %v262
      %v519 = vunpack.c.l.b16 %v263
      %v520 = vunpack.c.l.b16 %v264
      %v521 = vunpack.c.l.b16 %v265
      %v522 = vunpack.c.l.b16 %v266
      %v523 = vunpack.c.l.b16 %v267
      %v524 = vunpack.c.l.b16 %v268
      %v525 = vunpack.c.l.b16 %v269
      %v526 = vunpack.c.l.b16 %v270
      %v527 = vunpack.c.l.b16 %v271
      %v528 = vunpack.c.l.b16 %v272
      %v529 = vunpack.c.l.b16 %v273
      %v530 = vunpack.c.l.b16 %v274
      %v531 = vunpack.c.l.b16 %v275
      %v532 = vunpack.c.l.b16 %v276
      %v533 = vunpack.c.l.b16 %v277
      %v534 = vunpack.c.l.b16 %v278
      %v535 = vunpack.c.l.b16 %v279
      %v536 = vunpack.c.l.b16 %v280
      %v537 = vunpack.c.l.b16 %v281
      %v538 = vunpack.c.l.b16 %v282
      %v539 = vunpack.c.l.b16 %v283
      %v540 = vunpack.c.l.b16 %v284
      %v541 = vunpack.c.l.b16 %v285
      %v542 = vpack.c.b16 %v431, %v430
      %v543 = vpack.c.b16 %v433, %v432
      %v544 = vpack.c.b16 %v435, %v434
      %v545 = vpack.c.b16 %v437, %v436
      %v546 = vpack.c.b16 %v439, %v438
      %v547 = vpack.c.b16 %v441, %v440
      %v548 = vpack.c.b16 %v443, %v442
      %v549 = vpack.c.b16 %v445, %v444
      %v550 = vpack.c.b16 %v447, %v446
      %v551 = vpack.c.b16 %v449, %v448
      %v552 = vpack.c.b16 %v451, %v450
      %v553 = vpack.c.b16 %v453, %v452
      %v554 = vpack.c.b16 %v455, %v454
      %v555 = vpack.c.b16 %v457, %v456
      %v556 = vpack.c.b16 %v459, %v458
      %v557 = vpack.c.b16 %v461, %v460
      %v558 = vpack.c.b16 %v463, %v462
      %v559 = vpack.c.b16 %v465, %v464
      %v560 = vpack.c.b16 %v467, %v466
      %v561 = vpack.c.b16 %v469, %v468
      %v562 = vpack.c.b16 %v471, %v470
      %v563 = vpack.c.b16 %v473, %v472
      %v564 = vpack.c.b16 %v475, %v474
      %v565 = vpack.c.b16 %v477, %v476
      %v566 = vpack.c.b16 %v479, %v478
      %v567 = vpack.c.b16 %v481, %v480
      %v568 = vpack.c.b16 %v483, %v482
      %v569 = vpack.c.b16 %v485, %v484
      %v570 = vpack.c.b16 %v487, %v486
      %v571 = vpack.c.b16 %v489, %v488
      %v572 = vpack.c.b16 %v491, %v490
      %v573 = vpack.c.b16 %v493, %v492
      %v574 = vpack.c.b16 %v495, %v494
      %v575 = vpack.c.b16 %v497, %v496
      %v576 = vpack.c.b16 %v499, %v498
      %v577 = vpack.c.b16 %v501, %v500
      %v578 = vpack.c.b16 %v503, %v502
      %v579 = vpack.c.b16 %v505, %v504
      %v580 = vpack.c.b16 %v507, %v506
      %v581 = vpack.c.b16 %v509, %v508
      %v582 = vpack.c.b16 %v511, %v510
      %v583 = vpack.c.b16 %v513, %v512
      %v584 = vpack.c.b16 %v515, %v514
      %v585 = vpack.c.b16 %v517, %v516
      %v586 = vpack.c.b16 %v519, %v518
      %v587 = vpack.c.b16 %v521, %v520
      %v588 = vpack.c.b16 %v523, %v522
      %v589 = vpack.c.b16 %v525, %v524
      %v590 = vpack.c.b16 %v527, %v526
      %v591 = vpack.c.b16 %v529, %v528
      %v592 = vpack.c.b16 %v531, %v530
      %v593 = vpack.c.b16 %v533, %v532
      %v594 = vpack.c.b16 %v535, %v534
      %v595 = vpack.c.b16 %v537, %v536
      %v596 = vpack.c.b16 %v539, %v538
      %v597 = vpack.c.b16 %v541, %v540
      %654 = vmatprep.subr.bf16.mxu0 0
      %655 = vmatpush1.bf16.msra.mxu0 %v542
      %656 = vmatprep.subr.bf16.mxu0 0
      %657 = vmatpush1.bf16.msra.mxu0 %v543
      %658 = vmatprep.subr.bf16.mxu0 0
      %659 = vmatpush1.bf16.msra.mxu0 %v544
      %660 = vmatprep.subr.bf16.mxu0 0
      %661 = vmatpush1.bf16.msra.mxu0 %v545
      %662 = vmatprep.subr.bf16.mxu0 0
      %663 = vmatpush1.bf16.msra.mxu0 %v546
      %664 = vmatprep.subr.bf16.mxu0 0
      %665 = vmatpush1.bf16.msra.mxu0 %v547
      %666 = vmatprep.subr.bf16.mxu0 0
      %667 = vmatpush1.bf16.msra.mxu0 %v548
      %668 = vmatprep.subr.bf16.mxu0 0
      %669 = vmatpush1.bf16.msra.mxu0 %v549
      %670 = vmatprep.subr.bf16.mxu0 0
      %671 = vmatpush1.bf16.msra.mxu0 %v550
      %672 = vmatprep.subr.bf16.mxu0 0
      %673 = vmatpush1.bf16.msra.mxu0 %v551
      %674 = vmatprep.subr.bf16.mxu0 0
      %675 = vmatpush1.bf16.msra.mxu0 %v552
      %676 = vmatprep.subr.bf16.mxu0 0
      %677 = vmatpush1.bf16.msra.mxu0 %v553
      %678 = vmatprep.subr.bf16.mxu0 0
      %679 = vmatpush1.bf16.msra.mxu0 %v554
      %680 = vmatprep.subr.bf16.mxu0 0
      %681 = vmatpush1.bf16.msra.mxu0 %v555
      %682 = vmatprep.subr.bf16.mxu0 0
      %683 = vmatpush1.bf16.msra.mxu0 %v556
      %684 = vmatprep.subr.bf16.mxu0 0
      %685 = vmatpush1.bf16.msra.mxu0 %v557
      %686 = vmatprep.mubr.bf16.mxu0 %v305
      %687 = vmatmul.mubr.bf16.gmra.mrb[0].mxu0 %v304
      %v688 = vpop.f32.mrb[0].mxu0
      %v689 = vadd.f32 %v291, %v688
      %v690 = vpop.f32.mrb[0].mxu0
      %v691 = vpop.f32.mrb[0].mxu0
      %v692 = vpop.f32.mrb[0].mxu0
      %693 = vdwg.mxu0
      %694 = vmatprep.subr.bf16.mxu0 0
      %695 = vmatpush1.bf16.msra.mxu0 %v558
      %696 = vmatprep.subr.bf16.mxu0 0
      %697 = vmatpush1.bf16.msra.mxu0 %v559
      %698 = vmatprep.subr.bf16.mxu0 0
      %699 = vmatpush1.bf16.msra.mxu0 %v560
      %700 = vmatprep.subr.bf16.mxu0 0
      %701 = vmatpush1.bf16.msra.mxu0 %v561
      %702 = vmatprep.subr.bf16.mxu0 0
      %703 = vmatpush1.bf16.msra.mxu0 %v562
      %704 = vmatprep.subr.bf16.mxu0 0
      %705 = vmatpush1.bf16.msra.mxu0 %v563
      %706 = vmatprep.subr.bf16.mxu0 0
      %707 = vmatpush1.bf16.msra.mxu0 %v564
      %708 = vmatprep.subr.bf16.mxu0 0
      %709 = vmatpush1.bf16.msra.mxu0 %v565
      %710 = vmatprep.subr.bf16.mxu0 0
      %711 = vmatpush1.bf16.msra.mxu0 %v566
      %712 = vmatprep.subr.bf16.mxu0 0
      %713 = vmatpush1.bf16.msra.mxu0 %v567
      %714 = vmatprep.subr.bf16.mxu0 0
      %715 = vmatpush1.bf16.msra.mxu0 %v568
      %716 = vmatprep.subr.bf16.mxu0 0
      %717 = vmatpush1.bf16.msra.mxu0 %v569
      %718 = vmatprep.subr.bf16.mxu0 0
      %719 = vmatpush1.bf16.msra.mxu0 %v570
      %720 = vmatprep.subr.bf16.mxu0 0
      %721 = vmatpush1.bf16.msra.mxu0 %v571
      %722 = vmatprep.subr.bf16.mxu0 0
      %723 = vmatpush1.bf16.msra.mxu0 %v572
      %724 = vmatprep.subr.bf16.mxu0 0
      %725 = vmatpush1.bf16.msra.mxu0 %v573
      %726 = vmatprep.mubr.bf16.mxu0 %v307
      %727 = vmatmul.mubr.bf16.gmra.mrb[0].mxu0 %v306
      %v728 = vpop.f32.mrb[0].mxu0
      %v729 = vadd.f32 %v689, %v728
      %v730 = vpop.f32.mrb[0].mxu0
      %v731 = vpop.f32.mrb[0].mxu0
      %v732 = vpop.f32.mrb[0].mxu0
      %733 = vdwg.mxu0
      %734 = vmatprep.subr.bf16.mxu0 0
      %735 = vmatpush1.bf16.msra.mxu0 %v574
      %736 = vmatprep.subr.bf16.mxu0 0
      %737 = vmatpush1.bf16.msra.mxu0 %v575
      %738 = vmatprep.subr.bf16.mxu0 0
      %739 = vmatpush1.bf16.msra.mxu0 %v576
      %740 = vmatprep.subr.bf16.mxu0 0
      %741 = vmatpush1.bf16.msra.mxu0 %v577
      %742 = vmatprep.subr.bf16.mxu0 0
      %743 = vmatpush1.bf16.msra.mxu0 %v578
      %744 = vmatprep.subr.bf16.mxu0 0
      %745 = vmatpush1.bf16.msra.mxu0 %v579
      %746 = vmatprep.subr.bf16.mxu0 0
      %747 = vmatpush1.bf16.msra.mxu0 %v580
      %748 = vmatprep.subr.bf16.mxu0 0
      %749 = vmatpush1.bf16.msra.mxu0 %v581
      %750 = vmatprep.subr.bf16.mxu0 0
      %751 = vmatpush1.bf16.msra.mxu0 %v582
      %752 = vmatprep.subr.bf16.mxu0 0
      %753 = vmatpush1.bf16.msra.mxu0 %v583
      %754 = vmatprep.subr.bf16.mxu0 0
      %755 = vmatpush1.bf16.msra.mxu0 %v584
      %756 = vmatprep.subr.bf16.mxu0 0
      %757 = vmatpush1.bf16.msra.mxu0 %v585
      %758 = vmatprep.subr.bf16.mxu0 0
      %759 = vmatpush1.bf16.msra.mxu0 %v586
      %760 = vmatprep.subr.bf16.mxu0 0
      %761 = vmatpush1.bf16.msra.mxu0 %v587
      %762 = vmatprep.subr.bf16.mxu0 0
      %763 = vmatpush1.bf16.msra.mxu0 %v588
      %764 = vmatprep.subr.bf16.mxu0 0
      %765 = vmatpush1.bf16.msra.mxu0 %v589
      %766 = vmatprep.mubr.bf16.mxu0 %v309
      %767 = vmatmul.mubr.bf16.gmra.mrb[0].mxu0 %v308
      %v768 = vpop.f32.mrb[0].mxu0
      %v769 = vadd.f32 %v729, %v768
      %v770 = vpop.f32.mrb[0].mxu0
      %v771 = vpop.f32.mrb[0].mxu0
      %v772 = vpop.f32.mrb[0].mxu0
      %773 = vdwg.mxu0
      %774 = vmatprep.subr.bf16.mxu0 0
      %775 = vmatpush1.bf16.msra.mxu0 %v590
      %776 = vmatprep.subr.bf16.mxu0 0
      %777 = vmatpush1.bf16.msra.mxu0 %v591
      %778 = vmatprep.subr.bf16.mxu0 0
      %779 = vmatpush1.bf16.msra.mxu0 %v592
      %780 = vmatprep.subr.bf16.mxu0 0
      %781 = vmatpush1.bf16.msra.mxu0 %v593
      %782 = vmatprep.subr.bf16.mxu0 0
      %783 = vmatpush1.bf16.msra.mxu0 %v594
      %784 = vmatprep.subr.bf16.mxu0 0
      %785 = vmatpush1.bf16.msra.mxu0 %v595
      %786 = vmatprep.subr.bf16.mxu0 0
      %787 = vmatpush1.bf16.msra.mxu0 %v596
      %788 = vmatprep.subr.bf16.mxu0 0
      %789 = vmatpush1.bf16.msra.mxu0 %v597
      %790 = vmatprep.subr.bf16.mxu0 0
      %791 = vmatpush1.bf16.msra.mxu0 0
      %792 = vmatprep.subr.bf16.mxu0 0
      %793 = vmatpush1.bf16.msra.mxu0 0
      %794 = vmatprep.subr.bf16.mxu0 0
      %795 = vmatpush1.bf16.msra.mxu0 0
      %796 = vmatprep.subr.bf16.mxu0 0
      %797 = vmatpush1.bf16.msra.mxu0 0
      %798 = vmatprep.subr.bf16.mxu0 0
      %799 = vmatpush1.bf16.msra.mxu0 0
      %800 = vmatprep.subr.bf16.mxu0 0
      %801 = vmatpush1.bf16.msra.mxu0 0
      %802 = vmatprep.subr.bf16.mxu0 0
      %803 = vmatpush1.bf16.msra.mxu0 0
      %804 = vmatprep.subr.bf16.mxu0 0
      %805 = vmatpush1.bf16.msra.mxu0 0
      %806 = vmatprep.mubr.bf16.mxu0 0
      %807 = vmatmul.mubr.bf16.gmra.mrb[0].mxu0 %v310
      %v808 = vpop.f32.mrb[0].mxu0
      %v809 = vadd.f32 %v769, %v808
      %v810 = vpop.f32.mrb[0].mxu0
      %v811 = vpop.f32.mrb[0].mxu0
      %v812 = vpop.f32.mrb[0].mxu0
      %813 = vdwg.mxu0
      %v814 = vmax.f32 %v809, 0.0
      %v815 = vpack.c.bf16 %v814, %v814
      %816 = vst [vmem:[%s168] sm:$0xf] %v815
      %p817 = scmp.lt.s32.totalorder %s14, 3
      %s818 = scalar_select %p817, %s14, 3
      %s819 = smul.addr %s818, 4
      %s820 = scalar_lea.vmem %s3, %s819
      // Predicated region
      $region33: #{res_init_block_forward.2} parent=31 // pred_check
        %p821 = pneg %p100
      $region34: #{res_init_block_forward.2} parent=31 // pred_check_branch
        %823 = sbr.rel (%p821) target = $region36
      $region35: #{res_init_block_forward.2} parent=31 // pred_region
        _
      $region36: #{res_init_block_forward.2} parent=31 // pred_fallthru
        _
    $region32: #{res_init_block_forward.2} parent=5 // pred_fallthru
      _
    %p824 = scmp.le.s32.totalorder 2, %s9
    // Predicated region
    $region37: #{res_init_block_forward.2} parent=5 // pred_check
      %p825 = pneg %p824
    $region38: #{res_init_block_forward.2} parent=5 // pred_check_branch
      %827 = sbr.rel (%p825) target = $region40
    $region39: #{res_init_block_forward.2} parent=5 // pred_region
      %s828 = ssub.s32 %s9, 2
      // Predicated region
      $region41: #{res_init_block_forward.2} parent=39 // pred_check
        %p829 = pneg %p106
      $region42: #{res_init_block_forward.2} parent=39 // pred_check_branch
        %831 = sbr.rel (%p829) target = $region44
      $region43: #{res_init_block_forward.2} parent=39 // pred_region
        %p832 = scmp.lt.s32.totalorder %s15, 3
        %s833 = scalar_select %p832, %s15, 3
        %s834 = smul.addr %s833, 4
        %s835 = scalar_lea.vmem %s3, %s834
      $region44: #{res_init_block_forward.2} parent=39 // pred_fallthru
        _
    $region40: #{res_init_block_forward.2} parent=5 // pred_fallthru
      _
  $region6: #{res_init_block_forward.2} parent=0 // loop_footer
    %s13 = sadd.s32 1, %s9
  $region7: #{res_init_block_forward.2} parent=0 // loop_footer_branch
    %8 = sbr.rel target = $region3
  $region8: #{res_init_block_forward.2} parent=0 // loop_exit
    _

</llo_original>
